<compile_context>
chip_gen: v6e
topology: v6e:2x2x1
jax: 0.10.0
libtpu: 0.0.40
codegen_flags: <defaults>
</compile_context>

<pallas_src>
import math
import functools

import jax
import jax.numpy as jnp
from jax.experimental import pallas as pl
from jax.experimental.pallas import tpu as pltpu

EPS = 1e-5          # matches the book's custom LayerNorm
NEG_MASK = -1e30    # finite mask value (NaN-safe if tiles ever get fully masked)


# ---------------------------------------------------------------- kernel math

def _layernorm(x, gamma, beta):
    # mean / biased variance over last dim, exactly like the reference LayerNorm
    mean = jnp.mean(x, axis=-1, keepdims=True)
    c = x - mean
    var = jnp.mean(c * c, axis=-1, keepdims=True)        # unbiased=False
    return gamma * (c * jax.lax.rsqrt(var + EPS)) + beta


def _gelu_tanh(x):
    # book's GELU: 0.5*x*(1+tanh(sqrt(2/pi)*(x+0.044715*x^3)))  (f32 math)
    c = math.sqrt(2.0 / math.pi)
    return 0.5 * x * (1.0 + jnp.tanh(c * (x + 0.044715 * x * x * x)))


def _stack_kernel(n_heads,
                  x_ref,
                  g1, s1, wq, wk, wv, wo, bo,
                  g2, s2, w1, b1, w2, b2,
                  fg, fb,
                  out_ref):
    """All TransformerBlocks for one batch element.

    grid = (batch, layer).  out_ref's index map is constant along the layer
    axis, so it acts as the VMEM-resident running activation (f32).  Weights
    arrive as bf16 per-layer tiles.  Final LayerNorm fused into the last step.
    """
    layer = pl.program_id(1)
    last = pl.num_programs(1) - 1

    @pl.when(layer == 0)
    def _init():
        out_ref[...] = x_ref[...]

    x = out_ref[0]                       # (S, E) f32 resident activations
    S, E = x.shape
    H = n_heads
    Dh = E // H
    scale = 1.0 / math.sqrt(Dh)

    # ---- attention sublayer (shortcut -> norm1 -> att -> +shortcut) ----
    xn = _layernorm(x, g1[0], s1[0])
    xb = xn.astype(jnp.bfloat16)
    # qkv_bias=False: no bias adds, no bias DMAs.  Fold 1/sqrt(Dh) into q.
    q = jnp.dot(xb, wq[0], preferred_element_type=jnp.float32) * scale
    k = jnp.dot(xb, wk[0], preferred_element_type=jnp.float32)
    v = jnp.dot(xb, wv[0], preferred_element_type=jnp.float32)

    # Split heads via static lane slices, batch them into one (H, S, Dh) tensor.
    q3 = jnp.stack([q[:, h * Dh:(h + 1) * Dh] for h in range(H)], axis=0)
    k3 = jnp.stack([k[:, h * Dh:(h + 1) * Dh] for h in range(H)], axis=0)
    v3 = jnp.stack([v[:, h * Dh:(h + 1) * Dh] for h in range(H)], axis=0)
    q3 = q3.astype(jnp.bfloat16)
    k3 = k3.astype(jnp.bfloat16)
    v3 = v3.astype(jnp.bfloat16)

    row = jax.lax.broadcasted_iota(jnp.int32, (S, S), 0)
    col = jax.lax.broadcasted_iota(jnp.int32, (S, S), 1)
    causal = (col > row)[None, :, :]     # True above the diagonal -> masked

    # TODO(synk): flash-style query/key tiling with online softmax for long S
    # (here the whole (H, S, S) score tile fits VMEM at these sizes).
    scores = jnp.einsum('hqd,hkd->hqk', q3, k3,
                        preferred_element_type=jnp.float32)       # (H, S, S)
    scores = jnp.where(causal, NEG_MASK, scores)
    m = jnp.max(scores, axis=-1, keepdims=True)
    e = jnp.exp(scores - m)
    p = e * pl.reciprocal(jnp.sum(e, axis=-1, keepdims=True), approx=True)

    ctx_h = jnp.einsum('hqk,hkd->hqd', p.astype(jnp.bfloat16), v3,
                       preferred_element_type=jnp.float32)        # (H, S, Dh)
    ctx = jnp.concatenate([ctx_h[h] for h in range(H)], axis=-1)  # (S, E)

    att = jnp.dot(ctx.astype(jnp.bfloat16), wo[0],
                  preferred_element_type=jnp.float32) + bo[0]
    x = x + att                          # drop_shortcut == identity (p = 0)

    # ---- feed-forward sublayer (shortcut -> norm2 -> ff -> +shortcut) ----
    xn2 = _layernorm(x, g2[0], s2[0])
    h1 = jnp.dot(xn2.astype(jnp.bfloat16), w1[0],
                 preferred_element_type=jnp.float32) + b1[0]
    h1 = _gelu_tanh(h1)                  # f32 elementwise (v5e-friendly)
    ff = jnp.dot(h1.astype(jnp.bfloat16), w2[0],
                 preferred_element_type=jnp.float32) + b2[0]
    out_ref[0] = x + ff

    # Fuse final_norm into the last layer step (avoids another HBM round trip
    # and lets the LM-head kernel stream only the vocab-tiled weight).
    @pl.when(layer == last)
    def _finalize():
        out_ref[0] = _layernorm(out_ref[0], fg[...], fb[...])


def _lm_head_kernel(x_ref, w_ref, out_ref):
    """out_head (no bias) for one batch element x one vocab tile."""
    xn = x_ref[0]                        # (S, E) f32, already final-normed
    out_ref[0] = jnp.dot(xn.astype(jnp.bfloat16), w_ref[...],
                         preferred_element_type=jnp.float32)


# ---------------------------------------------------------------- wrappers

_STACKED = ("G1", "S1", "WQ", "WK", "WV", "WO", "BO",
            "G2", "S2", "W1", "B1", "W2", "B2")

_VMEM_LIMIT = 48 * 1024 * 1024   # explicit scoped-VMEM budget (fits v7x 64 MiB)


def run_blocks(x, params, n_heads):
    B, S, E = x.shape
    L = params["WQ"].shape[0]
    stacked = [params[n] for n in _STACKED]

    def stacked_spec(arr):
        _, a, b = arr.shape
        return pl.BlockSpec((1, a, b), lambda bi, li: (li, 0, 0))

    in_specs = ([pl.BlockSpec((1, S, E), lambda bi, li: (bi, 0, 0))]
                + [stacked_spec(a) for a in stacked]
                + [pl.BlockSpec((1, E), lambda bi, li: (0, 0)),
                   pl.BlockSpec((1, E), lambda bi, li: (0, 0))])

    return pl.pallas_call(
        functools.partial(_stack_kernel, n_heads),
        out_shape=jax.ShapeDtypeStruct((B, S, E), jnp.float32),
        grid=(B, L),
        in_specs=in_specs,
        out_specs=pl.BlockSpec((1, S, E), lambda bi, li: (bi, 0, 0)),
        compiler_params=pltpu.CompilerParams(
            dimension_semantics=("parallel", "arbitrary"),
            vmem_limit_bytes=_VMEM_LIMIT),
    )(x, *stacked, params["final_gamma"], params["final_beta"])


def _pick_vocab_tile(V):
    for tn in (512, 256, 128):
        if V % tn == 0:
            return tn
    return V


def run_lm_head(x, wout):
    B, S, E = x.shape
    V = wout.shape[1]
    TN = _pick_vocab_tile(V)
    return pl.pallas_call(
        _lm_head_kernel,
        out_shape=jax.ShapeDtypeStruct((B, S, V), jnp.float32),
        grid=(B, pl.cdiv(V, TN)),
        in_specs=[pl.BlockSpec((1, S, E), lambda b, j: (b, 0, 0)),
                  pl.BlockSpec((E, TN), lambda b, j: (0, j))],
        out_specs=pl.BlockSpec((1, S, TN), lambda b, j: (b, 0, j)),
        compiler_params=pltpu.CompilerParams(
            dimension_semantics=("parallel", "parallel"),
            vmem_limit_bytes=_VMEM_LIMIT),
    )(x, wout)


def gpt_forward(tokens, params, cfg):
    B, S = tokens.shape
    # Embedding lookups: plain-JAX glue (gather), identical to nn.Embedding.
    # TODO(synk): embedding gather could be a Pallas scalar-prefetch DMA-gather kernel.
    x = (params["tok_emb"][tokens].astype(jnp.float32)
         + params["pos_emb"][:S][None, :, :].astype(jnp.float32))
    # drop_emb: identity (drop_rate = 0.0 / eval mode)
    x = run_blocks(x, params, cfg["n_heads"])      # all layers + final_norm
    return run_lm_head(x, params["out_head"])      # vocab-tiled out_head


# ---------------------------------------------------------------- params

def init_gpt_params(key, cfg):
    E, V = cfg["emb_dim"], cfg["vocab_size"]
    C, L = cfg["context_length"], cfg["n_layers"]
    Hid = 4 * E
    keys = jax.random.split(key, 9)

    def nrm(k, shape, dtype=jnp.bfloat16):
        return (0.02 * jax.random.normal(k, shape, dtype=jnp.float32)).astype(dtype)

    ones_le = jnp.ones((L, 1, E), jnp.float32)
    zeros_le = jnp.zeros((L, 1, E), jnp.float32)
    return {
        # bf16 weight storage halves HBM traffic; f32 LN params / biases.
        "tok_emb": nrm(keys[0], (V, E)),
        "pos_emb": nrm(keys[1], (C, E)),
        "out_head": nrm(keys[2], (E, V)),            # (in, out) layout, no bias
        "final_gamma": jnp.ones((1, E), jnp.float32),
        "final_beta": jnp.zeros((1, E), jnp.float32),
        # per-layer stacks (leading L dim, indexed by the layer grid axis)
        "G1": ones_le, "S1": zeros_le,
        "WQ": nrm(keys[3], (L, E, E)),               # qkv_bias=False -> no biases
        "WK": nrm(keys[4], (L, E, E)),
        "WV": nrm(keys[5], (L, E, E)),
        "WO": nrm(keys[6], (L, E, E)),
        "BO": zeros_le,
        "G2": ones_le, "S2": zeros_le,
        "W1": nrm(keys[7], (L, E, Hid)),
        "B1": jnp.zeros((L, 1, Hid), jnp.float32),
        "W2": nrm(keys[8], (L, Hid, E)),
        "B2": zeros_le,
    }


# ---------------------------------------------------------------- main

if __name__ == "__main__":
    cfg = dict(vocab_size=128, context_length=16, emb_dim=32,
               n_heads=2, n_layers=2, drop_rate=0.0, qkv_bias=False)

    key = jax.random.PRNGKey(0)
    pkey, xkey = jax.random.split(key)
    params = init_gpt_params(pkey, cfg)

    batch, seq = 2, 8
    tokens = jax.random.randint(xkey, (batch, seq), 0, cfg["vocab_size"],
                                dtype=jnp.int32)

    logits = gpt_forward(tokens, params, cfg)
    logits = jax.block_until_ready(logits)

    assert logits.shape == (batch, seq, cfg["vocab_size"])
    assert bool(jnp.all(jnp.isfinite(logits)))
    print("KERNEL_OK")
</pallas_src>

<mosaic_0001>
module attributes {stable_mosaic.version = 11 : i64} {
  func.func @_stack_kernel(%arg0: i32, %arg1: i32, %arg2: memref<1x8x32xf32, #tpu.memory_space<vmem>>, %arg3: memref<1x1x32xf32, #tpu.memory_space<vmem>>, %arg4: memref<1x1x32xf32, #tpu.memory_space<vmem>>, %arg5: memref<1x32x32xbf16, #tpu.memory_space<vmem>>, %arg6: memref<1x32x32xbf16, #tpu.memory_space<vmem>>, %arg7: memref<1x32x32xbf16, #tpu.memory_space<vmem>>, %arg8: memref<1x32x32xbf16, #tpu.memory_space<vmem>>, %arg9: memref<1x1x32xf32, #tpu.memory_space<vmem>>, %arg10: memref<1x1x32xf32, #tpu.memory_space<vmem>>, %arg11: memref<1x1x32xf32, #tpu.memory_space<vmem>>, %arg12: memref<1x32x128xbf16, #tpu.memory_space<vmem>>, %arg13: memref<1x1x128xf32, #tpu.memory_space<vmem>>, %arg14: memref<1x128x32xbf16, #tpu.memory_space<vmem>>, %arg15: memref<1x1x32xf32, #tpu.memory_space<vmem>>, %arg16: memref<1x32xf32, #tpu.memory_space<vmem>>, %arg17: memref<1x32xf32, #tpu.memory_space<vmem>>, %arg18: memref<1x8x32xf32, #tpu.memory_space<vmem>>) attributes {dimension_semantics = [#tpu.dimension_semantics<parallel>, #tpu.dimension_semantics<arbitrary>], iteration_bounds = array<i64: 2, 2>, scalar_prefetch = 0 : i64, scratch_operands = 0 : i64, tpu.core_type = #tpu.core_type<tc>, window_params = [{transform_indices = @transform_0, window_bounds = array<i64: 1, 8, 32>}, {transform_indices = @transform_1, window_bounds = array<i64: 1, 1, 32>}, {transform_indices = @transform_2, window_bounds = array<i64: 1, 1, 32>}, {transform_indices = @transform_3, window_bounds = array<i64: 1, 32, 32>}, {transform_indices = @transform_4, window_bounds = array<i64: 1, 32, 32>}, {transform_indices = @transform_5, window_bounds = array<i64: 1, 32, 32>}, {transform_indices = @transform_6, window_bounds = array<i64: 1, 32, 32>}, {transform_indices = @transform_7, window_bounds = array<i64: 1, 1, 32>}, {transform_indices = @transform_8, window_bounds = array<i64: 1, 1, 32>}, {transform_indices = @transform_9, window_bounds = array<i64: 1, 1, 32>}, {transform_indices = @transform_10, window_bounds = array<i64: 1, 32, 128>}, {transform_indices = @transform_11, window_bounds = array<i64: 1, 1, 128>}, {transform_indices = @transform_12, window_bounds = array<i64: 1, 128, 32>}, {transform_indices = @transform_13, window_bounds = array<i64: 1, 1, 32>}, {pipeline_mode = #tpu.pipeline_mode<synchronous>, transform_indices = @transform_14, window_bounds = array<i64: 1, 32>}, {pipeline_mode = #tpu.pipeline_mode<synchronous>, transform_indices = @transform_15, window_bounds = array<i64: 1, 32>}, {transform_indices = @transform_16, window_bounds = array<i64: 1, 8, 32>}]} {
    %c0_i32 = arith.constant 0 : i32
    %0 = arith.cmpi eq, %arg1, %c0_i32 : i32
    %1 = arith.extui %0 : i1 to i32
    %c0_i32_0 = arith.constant 0 : i32
    %2 = arith.cmpi ne, %1, %c0_i32_0 : i32
    scf.if %2 {
      %c0_71 = arith.constant 0 : index
      %c0_72 = arith.constant 0 : index
      %c0_73 = arith.constant 0 : index
      %154 = vector.load %arg2[%c0_71, %c0_72, %c0_73] : memref<1x8x32xf32, #tpu.memory_space<vmem>>, vector<1x8x32xf32>
      %c0_74 = arith.constant 0 : index
      %c0_75 = arith.constant 0 : index
      %c0_76 = arith.constant 0 : index
      %155 = vector.load %arg18[%c0_74, %c0_75, %c0_76] : memref<1x8x32xf32, #tpu.memory_space<vmem>>, vector<1x8x32xf32>
      tpu.vector_store %arg18[%c0_74, %c0_75, %c0_76], %154 {strides = array<i32>} : memref<1x8x32xf32, #tpu.memory_space<vmem>>, vector<1x8x32xf32>,
    } else {
    }
    %c0 = arith.constant 0 : index
    %c0_1 = arith.constant 0 : index
    %c0_2 = arith.constant 0 : index
    %3 = vector.load %arg18[%c0, %c0_1, %c0_2] : memref<1x8x32xf32, #tpu.memory_space<vmem>>, vector<1x8x32xf32>
    %4 = vector.shape_cast %3 : vector<1x8x32xf32> to vector<8x32xf32>
    %c0_3 = arith.constant 0 : index
    %c0_4 = arith.constant 0 : index
    %c0_5 = arith.constant 0 : index
    %5 = vector.load %arg3[%c0_3, %c0_4, %c0_5] : memref<1x1x32xf32, #tpu.memory_space<vmem>>, vector<1x1x32xf32>
    %6 = vector.shape_cast %5 : vector<1x1x32xf32> to vector<1x32xf32>
    %c0_6 = arith.constant 0 : index
    %c0_7 = arith.constant 0 : index
    %c0_8 = arith.constant 0 : index
    %7 = vector.load %arg4[%c0_6, %c0_7, %c0_8] : memref<1x1x32xf32, #tpu.memory_space<vmem>>, vector<1x1x32xf32>
    %8 = vector.shape_cast %7 : vector<1x1x32xf32> to vector<1x32xf32>
    %cst = arith.constant dense<0.000000e+00> : vector<8xf32>
    %9 = vector.multi_reduction <add>, %4, %cst [1] : vector<8x32xf32> to vector<8xf32>
    %10 = vector.shape_cast %9 : vector<8xf32> to vector<8x1xf32>
    %cst_9 = arith.constant 3.200000e+01 : f32
    %11 = vector.broadcast %cst_9 : f32 to vector<8x1xf32>
    %12 = arith.divf %10, %11 : vector<8x1xf32>
    %13 = vector.broadcast %12 : vector<8x1xf32> to vector<8x32xf32>
    %14 = arith.subf %4, %13 : vector<8x32xf32>
    %15 = arith.mulf %14, %14 : vector<8x32xf32>
    %cst_10 = arith.constant dense<0.000000e+00> : vector<8xf32>
    %16 = vector.multi_reduction <add>, %15, %cst_10 [1] : vector<8x32xf32> to vector<8xf32>
    %17 = vector.shape_cast %16 : vector<8xf32> to vector<8x1xf32>
    %cst_11 = arith.constant 3.200000e+01 : f32
    %18 = vector.broadcast %cst_11 : f32 to vector<8x1xf32>
    %19 = arith.divf %17, %18 : vector<8x1xf32>
    %cst_12 = arith.constant 9.99999974E-6 : f32
    %20 = vector.broadcast %cst_12 : f32 to vector<8x1xf32>
    %21 = arith.addf %19, %20 : vector<8x1xf32>
    %22 = math.rsqrt %21 : vector<8x1xf32>
    %23 = vector.broadcast %22 : vector<8x1xf32> to vector<8x32xf32>
    %24 = arith.mulf %14, %23 : vector<8x32xf32>
    %25 = vector.broadcast %6 : vector<1x32xf32> to vector<8x32xf32>
    %26 = arith.mulf %25, %24 : vector<8x32xf32>
    %27 = vector.broadcast %8 : vector<1x32xf32> to vector<8x32xf32>
    %28 = arith.addf %26, %27 : vector<8x32xf32>
    %29 = arith.truncf %28 : vector<8x32xf32> to vector<8x32xbf16>
    %c0_13 = arith.constant 0 : index
    %c0_14 = arith.constant 0 : index
    %c0_15 = arith.constant 0 : index
    %30 = vector.load %arg5[%c0_13, %c0_14, %c0_15] : memref<1x32x32xbf16, #tpu.memory_space<vmem>>, vector<1x32x32xbf16>
    %31 = vector.shape_cast %30 : vector<1x32x32xbf16> to vector<32x32xbf16>
    %cst_16 = arith.constant dense<0.000000e+00> : vector<8x32xf32>
    %32 = tpu.matmul %29, %31, %cst_16 {dimension_numbers = #tpu.dot_dimension_numbers<[1], [0], [0], [1], [0, 0, 1, 1], [], []>} : vector<8x32xbf16>, vector<32x32xbf16>, vector<8x32xf32> -> vector<8x32xf32>
    %cst_17 = arith.constant 2.500000e-01 : f32
    %33 = vector.broadcast %cst_17 : f32 to vector<8x32xf32>
    %34 = arith.mulf %32, %33 : vector<8x32xf32>
    %c0_18 = arith.constant 0 : index
    %c0_19 = arith.constant 0 : index
    %c0_20 = arith.constant 0 : index
    %35 = vector.load %arg6[%c0_18, %c0_19, %c0_20] : memref<1x32x32xbf16, #tpu.memory_space<vmem>>, vector<1x32x32xbf16>
    %36 = vector.shape_cast %35 : vector<1x32x32xbf16> to vector<32x32xbf16>
    %cst_21 = arith.constant dense<0.000000e+00> : vector<8x32xf32>
    %37 = tpu.matmul %29, %36, %cst_21 {dimension_numbers = #tpu.dot_dimension_numbers<[1], [0], [0], [1], [0, 0, 1, 1], [], []>} : vector<8x32xbf16>, vector<32x32xbf16>, vector<8x32xf32> -> vector<8x32xf32>
    %c0_22 = arith.constant 0 : index
    %c0_23 = arith.constant 0 : index
    %c0_24 = arith.constant 0 : index
    %38 = vector.load %arg7[%c0_22, %c0_23, %c0_24] : memref<1x32x32xbf16, #tpu.memory_space<vmem>>, vector<1x32x32xbf16>
    %39 = vector.shape_cast %38 : vector<1x32x32xbf16> to vector<32x32xbf16>
    %cst_25 = arith.constant dense<0.000000e+00> : vector<8x32xf32>
    %40 = tpu.matmul %29, %39, %cst_25 {dimension_numbers = #tpu.dot_dimension_numbers<[1], [0], [0], [1], [0, 0, 1, 1], [], []>} : vector<8x32xbf16>, vector<32x32xbf16>, vector<8x32xf32> -> vector<8x32xf32>
    %41 = vector.extract_strided_slice %34 {offsets = [0, 0], sizes = [8, 16], strides = [1, 1]} : vector<8x32xf32> to vector<8x16xf32>
    %42 = vector.extract_strided_slice %34 {offsets = [0, 16], sizes = [8, 16], strides = [1, 1]} : vector<8x32xf32> to vector<8x16xf32>
    %43 = vector.shape_cast %41 : vector<8x16xf32> to vector<1x8x16xf32>
    %44 = vector.shape_cast %42 : vector<8x16xf32> to vector<1x8x16xf32>
    %45 = tpu.concatenate %43, %44 in 0 : vector<1x8x16xf32>, vector<1x8x16xf32> -> vector<2x8x16xf32>
    %46 = vector.extract_strided_slice %37 {offsets = [0, 0], sizes = [8, 16], strides = [1, 1]} : vector<8x32xf32> to vector<8x16xf32>
    %47 = vector.extract_strided_slice %37 {offsets = [0, 16], sizes = [8, 16], strides = [1, 1]} : vector<8x32xf32> to vector<8x16xf32>
    %48 = vector.shape_cast %46 : vector<8x16xf32> to vector<1x8x16xf32>
    %49 = vector.shape_cast %47 : vector<8x16xf32> to vector<1x8x16xf32>
    %50 = tpu.concatenate %48, %49 in 0 : vector<1x8x16xf32>, vector<1x8x16xf32> -> vector<2x8x16xf32>
    %51 = vector.extract_strided_slice %40 {offsets = [0, 0], sizes = [8, 16], strides = [1, 1]} : vector<8x32xf32> to vector<8x16xf32>
    %52 = vector.extract_strided_slice %40 {offsets = [0, 16], sizes = [8, 16], strides = [1, 1]} : vector<8x32xf32> to vector<8x16xf32>
    %53 = vector.shape_cast %51 : vector<8x16xf32> to vector<1x8x16xf32>
    %54 = vector.shape_cast %52 : vector<8x16xf32> to vector<1x8x16xf32>
    %55 = tpu.concatenate %53, %54 in 0 : vector<1x8x16xf32>, vector<1x8x16xf32> -> vector<2x8x16xf32>
    %56 = arith.truncf %45 : vector<2x8x16xf32> to vector<2x8x16xbf16>
    %57 = arith.truncf %50 : vector<2x8x16xf32> to vector<2x8x16xbf16>
    %58 = arith.truncf %55 : vector<2x8x16xf32> to vector<2x8x16xbf16>
    %59 = tpu.iota {dimensions = array<i32: 0>} : vector<8x8xi32>
    %60 = tpu.iota {dimensions = array<i32: 1>} : vector<8x8xi32>
    %61 = arith.cmpi sgt, %60, %59 : vector<8x8xi32>
    %62 = vector.shape_cast %61 : vector<8x8xi1> to vector<1x8x8xi1>
    "tpu.trace_start"() <{level = 10 : i32, message = "hqd,hkd->hqk"}> : () -> ()
    %cst_26 = arith.constant dense<0.000000e+00> : vector<2x8x8xf32>
    %63 = tpu.matmul %56, %57, %cst_26 {dimension_numbers = #tpu.dot_dimension_numbers<[2], [2], [1], [1], [0, 0, 0, 1, 1, 1], [0], [0]>} : vector<2x8x16xbf16>, vector<2x8x16xbf16>, vector<2x8x8xf32> -> vector<2x8x8xf32>
    %cst_27 = arith.constant -1.000000e+30 : f32
    "tpu.trace_stop"() : () -> ()
    %64 = vector.shape_cast %62 : vector<1x8x8xi1> to vector<1x8x8xi1>
    %65 = vector.broadcast %64 : vector<1x8x8xi1> to vector<2x8x8xi1>
    %66 = vector.broadcast %cst_27 : f32 to vector<2x8x8xf32>
    %67 = arith.select %65, %66, %63 : vector<2x8x8xi1>, vector<2x8x8xf32>
    %cst_28 = arith.constant dense<0xFF800000> : vector<2x8xf32>
    %68 = vector.multi_reduction <maximumf>, %67, %cst_28 [2] : vector<2x8x8xf32> to vector<2x8xf32>
    %69 = vector.shape_cast %68 : vector<2x8xf32> to vector<2x8x1xf32>
    %70 = vector.broadcast %69 : vector<2x8x1xf32> to vector<2x8x8xf32>
    %71 = arith.subf %67, %70 : vector<2x8x8xf32>
    %72 = math.exp %71 : vector<2x8x8xf32>
    %cst_29 = arith.constant dense<0.000000e+00> : vector<2x8xf32>
    %73 = vector.multi_reduction <add>, %72, %cst_29 [2] : vector<2x8x8xf32> to vector<2x8xf32>
    %74 = vector.shape_cast %73 : vector<2x8xf32> to vector<2x8x1xf32>
    %75 = tpu.reciprocal %74 {approx = true} : vector<2x8x1xf32> -> vector<2x8x1xf32>
    %76 = vector.broadcast %75 : vector<2x8x1xf32> to vector<2x8x8xf32>
    %77 = arith.mulf %72, %76 : vector<2x8x8xf32>
    %78 = arith.truncf %77 : vector<2x8x8xf32> to vector<2x8x8xbf16>
    "tpu.trace_start"() <{level = 10 : i32, message = "hqk,hkd->hqd"}> : () -> ()
    %cst_30 = arith.constant dense<0.000000e+00> : vector<2x8x16xf32>
    %79 = tpu.matmul %78, %58, %cst_30 {dimension_numbers = #tpu.dot_dimension_numbers<[2], [1], [1], [2], [0, 0, 0, 1, 1, 2], [0], [0]>} : vector<2x8x8xbf16>, vector<2x8x16xbf16>, vector<2x8x16xf32> -> vector<2x8x16xf32>
    "tpu.trace_stop"() : () -> ()
    %80 = vector.extract_strided_slice %79 {offsets = [0, 0, 0], sizes = [1, 8, 16], strides = [1, 1, 1]} : vector<2x8x16xf32> to vector<1x8x16xf32>
    %81 = vector.shape_cast %80 : vector<1x8x16xf32> to vector<8x16xf32>
    %82 = vector.extract_strided_slice %79 {offsets = [1, 0, 0], sizes = [1, 8, 16], strides = [1, 1, 1]} : vector<2x8x16xf32> to vector<1x8x16xf32>
    %83 = vector.shape_cast %82 : vector<1x8x16xf32> to vector<8x16xf32>
    %84 = tpu.concatenate %81, %83 in 1 : vector<8x16xf32>, vector<8x16xf32> -> vector<8x32xf32>
    %85 = arith.truncf %84 : vector<8x32xf32> to vector<8x32xbf16>
    %c0_31 = arith.constant 0 : index
    %c0_32 = arith.constant 0 : index
    %c0_33 = arith.constant 0 : index
    %86 = vector.load %arg8[%c0_31, %c0_32, %c0_33] : memref<1x32x32xbf16, #tpu.memory_space<vmem>>, vector<1x32x32xbf16>
    %87 = vector.shape_cast %86 : vector<1x32x32xbf16> to vector<32x32xbf16>
    %cst_34 = arith.constant dense<0.000000e+00> : vector<8x32xf32>
    %88 = tpu.matmul %85, %87, %cst_34 {dimension_numbers = #tpu.dot_dimension_numbers<[1], [0], [0], [1], [0, 0, 1, 1], [], []>} : vector<8x32xbf16>, vector<32x32xbf16>, vector<8x32xf32> -> vector<8x32xf32>
    %c0_35 = arith.constant 0 : index
    %c0_36 = arith.constant 0 : index
    %c0_37 = arith.constant 0 : index
    %89 = vector.load %arg9[%c0_35, %c0_36, %c0_37] : memref<1x1x32xf32, #tpu.memory_space<vmem>>, vector<1x1x32xf32>
    %90 = vector.shape_cast %89 : vector<1x1x32xf32> to vector<1x32xf32>
    %91 = vector.broadcast %90 : vector<1x32xf32> to vector<8x32xf32>
    %92 = arith.addf %88, %91 : vector<8x32xf32>
    %93 = arith.addf %4, %92 : vector<8x32xf32>
    %c0_38 = arith.constant 0 : index
    %c0_39 = arith.constant 0 : index
    %c0_40 = arith.constant 0 : index
    %94 = vector.load %arg10[%c0_38, %c0_39, %c0_40] : memref<1x1x32xf32, #tpu.memory_space<vmem>>, vector<1x1x32xf32>
    %95 = vector.shape_cast %94 : vector<1x1x32xf32> to vector<1x32xf32>
    %c0_41 = arith.constant 0 : index
    %c0_42 = arith.constant 0 : index
    %c0_43 = arith.constant 0 : index
    %96 = vector.load %arg11[%c0_41, %c0_42, %c0_43] : memref<1x1x32xf32, #tpu.memory_space<vmem>>, vector<1x1x32xf32>
    %97 = vector.shape_cast %96 : vector<1x1x32xf32> to vector<1x32xf32>
    %cst_44 = arith.constant dense<0.000000e+00> : vector<8xf32>
    %98 = vector.multi_reduction <add>, %93, %cst_44 [1] : vector<8x32xf32> to vector<8xf32>
    %99 = vector.shape_cast %98 : vector<8xf32> to vector<8x1xf32>
    %cst_45 = arith.constant 3.200000e+01 : f32
    %100 = vector.broadcast %cst_45 : f32 to vector<8x1xf32>
    %101 = arith.divf %99, %100 : vector<8x1xf32>
    %102 = vector.broadcast %101 : vector<8x1xf32> to vector<8x32xf32>
    %103 = arith.subf %93, %102 : vector<8x32xf32>
    %104 = arith.mulf %103, %103 : vector<8x32xf32>
    %cst_46 = arith.constant dense<0.000000e+00> : vector<8xf32>
    %105 = vector.multi_reduction <add>, %104, %cst_46 [1] : vector<8x32xf32> to vector<8xf32>
    %106 = vector.shape_cast %105 : vector<8xf32> to vector<8x1xf32>
    %cst_47 = arith.constant 3.200000e+01 : f32
    %107 = vector.broadcast %cst_47 : f32 to vector<8x1xf32>
    %108 = arith.divf %106, %107 : vector<8x1xf32>
    %cst_48 = arith.constant 9.99999974E-6 : f32
    %109 = vector.broadcast %cst_48 : f32 to vector<8x1xf32>
    %110 = arith.addf %108, %109 : vector<8x1xf32>
    %111 = math.rsqrt %110 : vector<8x1xf32>
    %112 = vector.broadcast %111 : vector<8x1xf32> to vector<8x32xf32>
    %113 = arith.mulf %103, %112 : vector<8x32xf32>
    %114 = vector.broadcast %95 : vector<1x32xf32> to vector<8x32xf32>
    %115 = arith.mulf %114, %113 : vector<8x32xf32>
    %116 = vector.broadcast %97 : vector<1x32xf32> to vector<8x32xf32>
    %117 = arith.addf %115, %116 : vector<8x32xf32>
    %118 = arith.truncf %117 : vector<8x32xf32> to vector<8x32xbf16>
    %c0_49 = arith.constant 0 : index
    %c0_50 = arith.constant 0 : index
    %c0_51 = arith.constant 0 : index
    %119 = vector.load %arg12[%c0_49, %c0_50, %c0_51] : memref<1x32x128xbf16, #tpu.memory_space<vmem>>, vector<1x32x128xbf16>
    %120 = vector.shape_cast %119 : vector<1x32x128xbf16> to vector<32x128xbf16>
    %cst_52 = arith.constant dense<0.000000e+00> : vector<8x128xf32>
    %121 = tpu.matmul %118, %120, %cst_52 {dimension_numbers = #tpu.dot_dimension_numbers<[1], [0], [0], [1], [0, 0, 1, 1], [], []>} : vector<8x32xbf16>, vector<32x128xbf16>, vector<8x128xf32> -> vector<8x128xf32>
    %c0_53 = arith.constant 0 : index
    %c0_54 = arith.constant 0 : index
    %c0_55 = arith.constant 0 : index
    %122 = vector.load %arg13[%c0_53, %c0_54, %c0_55] : memref<1x1x128xf32, #tpu.memory_space<vmem>>, vector<1x1x128xf32>
    %123 = vector.shape_cast %122 : vector<1x1x128xf32> to vector<1x128xf32>
    %124 = vector.broadcast %123 : vector<1x128xf32> to vector<8x128xf32>
    %125 = arith.addf %121, %124 : vector<8x128xf32>
    %cst_56 = arith.constant 5.000000e-01 : f32
    %126 = vector.broadcast %cst_56 : f32 to vector<8x128xf32>
    %127 = arith.mulf %126, %125 : vector<8x128xf32>
    %cst_57 = arith.constant 4.471500e-02 : f32
    %128 = vector.broadcast %cst_57 : f32 to vector<8x128xf32>
    %129 = arith.mulf %128, %125 : vector<8x128xf32>
    %130 = arith.mulf %129, %125 : vector<8x128xf32>
    %131 = arith.mulf %130, %125 : vector<8x128xf32>
    %132 = arith.addf %125, %131 : vector<8x128xf32>
    %cst_58 = arith.constant 0.797884583 : f32
    %133 = vector.broadcast %cst_58 : f32 to vector<8x128xf32>
    %134 = arith.mulf %133, %132 : vector<8x128xf32>
    %135 = math.tanh %134 : vector<8x128xf32>
    %cst_59 = arith.constant 1.000000e+00 : f32
    %136 = vector.broadcast %cst_59 : f32 to vector<8x128xf32>
    %137 = arith.addf %136, %135 : vector<8x128xf32>
    %138 = arith.mulf %127, %137 : vector<8x128xf32>
    %139 = arith.truncf %138 : vector<8x128xf32> to vector<8x128xbf16>
    %c0_60 = arith.constant 0 : index
    %c0_61 = arith.constant 0 : index
    %c0_62 = arith.constant 0 : index
    %140 = vector.load %arg14[%c0_60, %c0_61, %c0_62] : memref<1x128x32xbf16, #tpu.memory_space<vmem>>, vector<1x128x32xbf16>
    %141 = vector.shape_cast %140 : vector<1x128x32xbf16> to vector<128x32xbf16>
    %cst_63 = arith.constant dense<0.000000e+00> : vector<8x32xf32>
    %142 = tpu.matmul %139, %141, %cst_63 {dimension_numbers = #tpu.dot_dimension_numbers<[1], [0], [0], [1], [0, 0, 1, 1], [], []>} : vector<8x128xbf16>, vector<128x32xbf16>, vector<8x32xf32> -> vector<8x32xf32>
    %c0_64 = arith.constant 0 : index
    %c0_65 = arith.constant 0 : index
    %c0_66 = arith.constant 0 : index
    %143 = vector.load %arg15[%c0_64, %c0_65, %c0_66] : memref<1x1x32xf32, #tpu.memory_space<vmem>>, vector<1x1x32xf32>
    %144 = vector.shape_cast %143 : vector<1x1x32xf32> to vector<1x32xf32>
    %145 = vector.broadcast %144 : vector<1x32xf32> to vector<8x32xf32>
    %146 = arith.addf %142, %145 : vector<8x32xf32>
    %147 = arith.addf %93, %146 : vector<8x32xf32>
    %c0_67 = arith.constant 0 : index
    %c0_68 = arith.constant 0 : index
    %c0_69 = arith.constant 0 : index
    %148 = vector.load %arg18[%c0_67, %c0_68, %c0_69] : memref<1x8x32xf32, #tpu.memory_space<vmem>>, vector<1x8x32xf32>
    %149 = vector.shape_cast %148 : vector<1x8x32xf32> to vector<8x32xf32>
    %150 = vector.shape_cast %147 : vector<8x32xf32> to vector<1x8x32xf32>
    tpu.vector_store %arg18[%c0_67, %c0_68, %c0_69], %150 {strides = array<i32>} : memref<1x8x32xf32, #tpu.memory_space<vmem>>, vector<1x8x32xf32>,
    %c1_i32 = arith.constant 1 : i32
    %151 = arith.cmpi eq, %arg1, %c1_i32 : i32
    %152 = arith.extui %151 : i1 to i32
    %c0_i32_70 = arith.constant 0 : i32
    %153 = arith.cmpi ne, %152, %c0_i32_70 : i32
    scf.if %153 {
      %c0_71 = arith.constant 0 : index
      %c0_72 = arith.constant 0 : index
      %c0_73 = arith.constant 0 : index
      %154 = vector.load %arg18[%c0_71, %c0_72, %c0_73] : memref<1x8x32xf32, #tpu.memory_space<vmem>>, vector<1x8x32xf32>
      %155 = vector.shape_cast %154 : vector<1x8x32xf32> to vector<8x32xf32>
      %c0_74 = arith.constant 0 : index
      %c0_75 = arith.constant 0 : index
      %156 = vector.load %arg16[%c0_74, %c0_75] : memref<1x32xf32, #tpu.memory_space<vmem>>, vector<1x32xf32>
      %c0_76 = arith.constant 0 : index
      %c0_77 = arith.constant 0 : index
      %157 = vector.load %arg17[%c0_76, %c0_77] : memref<1x32xf32, #tpu.memory_space<vmem>>, vector<1x32xf32>
      %cst_78 = arith.constant dense<0.000000e+00> : vector<8xf32>
      %158 = vector.multi_reduction <add>, %155, %cst_78 [1] : vector<8x32xf32> to vector<8xf32>
      %159 = vector.shape_cast %158 : vector<8xf32> to vector<8x1xf32>
      %cst_79 = arith.constant 3.200000e+01 : f32
      %160 = vector.broadcast %cst_79 : f32 to vector<8x1xf32>
      %161 = arith.divf %159, %160 : vector<8x1xf32>
      %162 = vector.broadcast %161 : vector<8x1xf32> to vector<8x32xf32>
      %163 = arith.subf %155, %162 : vector<8x32xf32>
      %164 = arith.mulf %163, %163 : vector<8x32xf32>
      %cst_80 = arith.constant dense<0.000000e+00> : vector<8xf32>
      %165 = vector.multi_reduction <add>, %164, %cst_80 [1] : vector<8x32xf32> to vector<8xf32>
      %166 = vector.shape_cast %165 : vector<8xf32> to vector<8x1xf32>
      %cst_81 = arith.constant 3.200000e+01 : f32
      %167 = vector.broadcast %cst_81 : f32 to vector<8x1xf32>
      %168 = arith.divf %166, %167 : vector<8x1xf32>
      %cst_82 = arith.constant 9.99999974E-6 : f32
      %169 = vector.broadcast %cst_82 : f32 to vector<8x1xf32>
      %170 = arith.addf %168, %169 : vector<8x1xf32>
      %171 = math.rsqrt %170 : vector<8x1xf32>
      %172 = vector.broadcast %171 : vector<8x1xf32> to vector<8x32xf32>
      %173 = arith.mulf %163, %172 : vector<8x32xf32>
      %174 = vector.broadcast %156 : vector<1x32xf32> to vector<8x32xf32>
      %175 = arith.mulf %174, %173 : vector<8x32xf32>
      %176 = vector.broadcast %157 : vector<1x32xf32> to vector<8x32xf32>
      %177 = arith.addf %175, %176 : vector<8x32xf32>
      %c0_83 = arith.constant 0 : index
      %c0_84 = arith.constant 0 : index
      %c0_85 = arith.constant 0 : index
      %178 = vector.load %arg18[%c0_83, %c0_84, %c0_85] : memref<1x8x32xf32, #tpu.memory_space<vmem>>, vector<1x8x32xf32>
      %179 = vector.shape_cast %178 : vector<1x8x32xf32> to vector<8x32xf32>
      %180 = vector.shape_cast %177 : vector<8x32xf32> to vector<1x8x32xf32>
      tpu.vector_store %arg18[%c0_83, %c0_84, %c0_85], %180 {strides = array<i32>} : memref<1x8x32xf32, #tpu.memory_space<vmem>>, vector<1x8x32xf32>,
    } else {
    }
    return
  }
  func.func @transform_0(%arg0: i32, %arg1: i32) -> (i32, i32, i32) {
    %c0_i32 = arith.constant 0 : i32
    %c0_i32_0 = arith.constant 0 : i32
    %c0_i32_1 = arith.constant 0 : i32
    return %arg0, %c0_i32, %c0_i32_0 : i32, i32, i32
  }
  func.func @transform_1(%arg0: i32, %arg1: i32) -> (i32, i32, i32) {
    %c0_i32 = arith.constant 0 : i32
    %c0_i32_0 = arith.constant 0 : i32
    %c0_i32_1 = arith.constant 0 : i32
    return %arg1, %c0_i32, %c0_i32_0 : i32, i32, i32
  }
  func.func @transform_2(%arg0: i32, %arg1: i32) -> (i32, i32, i32) {
    %c0_i32 = arith.constant 0 : i32
    %c0_i32_0 = arith.constant 0 : i32
    %c0_i32_1 = arith.constant 0 : i32
    return %arg1, %c0_i32, %c0_i32_0 : i32, i32, i32
  }
  func.func @transform_3(%arg0: i32, %arg1: i32) -> (i32, i32, i32) {
    %c0_i32 = arith.constant 0 : i32
    %c0_i32_0 = arith.constant 0 : i32
    %c0_i32_1 = arith.constant 0 : i32
    return %arg1, %c0_i32, %c0_i32_0 : i32, i32, i32
  }
  func.func @transform_4(%arg0: i32, %arg1: i32) -> (i32, i32, i32) {
    %c0_i32 = arith.constant 0 : i32
    %c0_i32_0 = arith.constant 0 : i32
    %c0_i32_1 = arith.constant 0 : i32
    return %arg1, %c0_i32, %c0_i32_0 : i32, i32, i32
  }
  func.func @transform_5(%arg0: i32, %arg1: i32) -> (i32, i32, i32) {
    %c0_i32 = arith.constant 0 : i32
    %c0_i32_0 = arith.constant 0 : i32
    %c0_i32_1 = arith.constant 0 : i32
    return %arg1, %c0_i32, %c0_i32_0 : i32, i32, i32
  }
  func.func @transform_6(%arg0: i32, %arg1: i32) -> (i32, i32, i32) {
    %c0_i32 = arith.constant 0 : i32
    %c0_i32_0 = arith.constant 0 : i32
    %c0_i32_1 = arith.constant 0 : i32
    return %arg1, %c0_i32, %c0_i32_0 : i32, i32, i32
  }
  func.func @transform_7(%arg0: i32, %arg1: i32) -> (i32, i32, i32) {
    %c0_i32 = arith.constant 0 : i32
    %c0_i32_0 = arith.constant 0 : i32
    %c0_i32_1 = arith.constant 0 : i32
    return %arg1, %c0_i32, %c0_i32_0 : i32, i32, i32
  }
  func.func @transform_8(%arg0: i32, %arg1: i32) -> (i32, i32, i32) {
    %c0_i32 = arith.constant 0 : i32
    %c0_i32_0 = arith.constant 0 : i32
    %c0_i32_1 = arith.constant 0 : i32
    return %arg1, %c0_i32, %c0_i32_0 : i32, i32, i32
  }
  func.func @transform_9(%arg0: i32, %arg1: i32) -> (i32, i32, i32) {
    %c0_i32 = arith.constant 0 : i32
    %c0_i32_0 = arith.constant 0 : i32
    %c0_i32_1 = arith.constant 0 : i32
    return %arg1, %c0_i32, %c0_i32_0 : i32, i32, i32
  }
  func.func @transform_10(%arg0: i32, %arg1: i32) -> (i32, i32, i32) {
    %c0_i32 = arith.constant 0 : i32
    %c0_i32_0 = arith.constant 0 : i32
    %c0_i32_1 = arith.constant 0 : i32
    return %arg1, %c0_i32, %c0_i32_0 : i32, i32, i32
  }
  func.func @transform_11(%arg0: i32, %arg1: i32) -> (i32, i32, i32) {
    %c0_i32 = arith.constant 0 : i32
    %c0_i32_0 = arith.constant 0 : i32
    %c0_i32_1 = arith.constant 0 : i32
    return %arg1, %c0_i32, %c0_i32_0 : i32, i32, i32
  }
  func.func @transform_12(%arg0: i32, %arg1: i32) -> (i32, i32, i32) {
    %c0_i32 = arith.constant 0 : i32
    %c0_i32_0 = arith.constant 0 : i32
    %c0_i32_1 = arith.constant 0 : i32
    return %arg1, %c0_i32, %c0_i32_0 : i32, i32, i32
  }
  func.func @transform_13(%arg0: i32, %arg1: i32) -> (i32, i32, i32) {
    %c0_i32 = arith.constant 0 : i32
    %c0_i32_0 = arith.constant 0 : i32
    %c0_i32_1 = arith.constant 0 : i32
    return %arg1, %c0_i32, %c0_i32_0 : i32, i32, i32
  }
  func.func @transform_14(%arg0: i32, %arg1: i32) -> (i32, i32) {
    %c0_i32 = arith.constant 0 : i32
    %c0_i32_0 = arith.constant 0 : i32
    %c0_i32_1 = arith.constant 0 : i32
    return %c0_i32, %c0_i32_0 : i32, i32
  }
  func.func @transform_15(%arg0: i32, %arg1: i32) -> (i32, i32) {
    %c0_i32 = arith.constant 0 : i32
    %c0_i32_0 = arith.constant 0 : i32
    %c0_i32_1 = arith.constant 0 : i32
    return %c0_i32, %c0_i32_0 : i32, i32
  }
  func.func @transform_16(%arg0: i32, %arg1: i32) -> (i32, i32, i32) {
    %c0_i32 = arith.constant 0 : i32
    %c0_i32_0 = arith.constant 0 : i32
    %c0_i32_1 = arith.constant 0 : i32
    return %arg0, %c0_i32, %c0_i32_0 : i32, i32, i32
  }
}

</mosaic_0001>

<llo_original>
// kernel: tpu_custom_call.1
$region0: #{tpu_custom_call.1}
  #allocation0 [shape = 'u32[]', space=smem, size = 0x4, offset = 0x4, fixed_abs, tag = 'smem constant byte address 0x4 - core index']
  #allocation1 [shape = 'u32[144,128]{1,0:T(1,128)}', space=vmem, size = 0x12000, scoped, tag = 'internal scratch']
  %s0 = inlined_call_operand.hbm [shape: f32[2,8,32], index: 0, kind: input, shape index: {}]
  %s1 = inlined_call_operand.hbm [shape: f32[2,1,32], index: 1, kind: input, shape index: {}]
  %s2 = inlined_call_operand.vmem [shape: f32[2,1,32], index: 2, kind: input, shape index: {}]
  %s3 = inlined_call_operand.vmem [shape: bf16[2,32,32], index: 3, kind: input, shape index: {}]
  %s4 = inlined_call_operand.vmem [shape: bf16[2,32,32], index: 4, kind: input, shape index: {}]
  %s5 = inlined_call_operand.vmem [shape: bf16[2,32,32], index: 5, kind: input, shape index: {}]
  %s6 = inlined_call_operand.vmem [shape: bf16[2,32,32], index: 6, kind: input, shape index: {}]
  %s7 = inlined_call_operand.vmem [shape: f32[2,1,32], index: 7, kind: input, shape index: {}]
  %s8 = inlined_call_operand.vmem [shape: f32[2,1,32], index: 8, kind: input, shape index: {}]
  %s9 = inlined_call_operand.vmem [shape: f32[2,1,32], index: 9, kind: input, shape index: {}]
  %s10 = inlined_call_operand.vmem [shape: bf16[2,32,128], index: 10, kind: input, shape index: {}]
  %s11 = inlined_call_operand.vmem [shape: f32[2,1,128], index: 11, kind: input, shape index: {}]
  %s12 = inlined_call_operand.vmem [shape: bf16[2,128,32], index: 12, kind: input, shape index: {}]
  %s13 = inlined_call_operand.vmem [shape: f32[2,1,32], index: 13, kind: input, shape index: {}]
  %s14 = inlined_call_operand.vmem [shape: f32[1,32], index: 14, kind: input, shape index: {}]
  %s15 = inlined_call_operand.vmem [shape: f32[1,32], index: 15, kind: input, shape index: {}]
  %s16 = inlined_call_operand.hbm [shape: f32[2,8,32], index: 16, kind: output, shape index: {}]
  %s17 = sld [smem:[#allocation0]]
  $region113: #{tpu_custom_call.1} parent=0
    _
  %s19 = ssub.s32 1, %s17
  %s20 = scalar_select 0, %s19, %s17
  $region1: #{tpu_custom_call.1} parent=0
    #allocation2 [shape = 'u8[8192]{0}', space=vmem, size = 0x2000, scoped, tag = 'input window, operand 0']
    #allocation3 [shape = 's32[2]{0}', space=sflag, size = 0x8, scoped, tag = 'scoped memory for tpu_custom_call.1']
    #allocation4 [shape = 's32[2]{0}', space=sflag, size = 0x8, scoped, tag = 'scoped memory for tpu_custom_call.1']
    #allocation5 [shape = 'u8[1024]{0}', space=vmem, size = 0x400, scoped, tag = 'input window, operand 1']
    #allocation6 [shape = 's32[2]{0}', space=sflag, size = 0x8, scoped, tag = 'scoped memory for tpu_custom_call.1']
    #allocation7 [shape = 'u8[8192]{0}', space=vmem, size = 0x2000, scoped, tag = 'output window, operand 0']
    %21 = vsyncpa [#allocation3], 0
    %s22 = scalar_lea.sflag [#allocation3], 1
    %23 = vsyncpa %s22, 0
    %24 = vsyncpa [#allocation6], 0
    %s25 = scalar_lea.sflag [#allocation6], 1
    %26 = vsyncpa %s25, 0
    %27 = vsyncpa [#allocation4], 0
    %s28 = scalar_lea.sflag [#allocation4], 1
    %29 = vsyncpa %s28, 0
    loop: start=0, step=1, limit=6
    $region2: #{tpu_custom_call.1} parent=1 // loop_pre_header
      _
    $region3: #{tpu_custom_call.1} parent=1 // loop_header
      %s31 = sphi 0, %s35
      %p32 = scmp.ge.s32.totalorder %s31, 6
      %s38 = sphi 0, %s50
      %s39 = sphi 0, %s46
      %s40 = sphi 0, %s38
      %s41 = sphi 0, %s39
      %s42 = sphi 0, %s40
      %s43 = sphi 0, %s41
      %s53 = sphi 0, %s55
      %s56 = sphi 0, %s53
      %s57 = sphi 0, %s56
      %s73 = sphi 0, %s57
      %s79 = sphi 0, %s81
      %s82 = sphi 0, %s79
      %s83 = sphi 0, %s82
      %s99 = sphi 0, %s83
      %s105 = sphi 0, %s107
      %s108 = sphi 0, %s105
      %s109 = sphi 0, %s108
      %s125 = sphi 0, %s109
      %s131 = sphi 0, %s133
      %s134 = sphi 0, %s131
      %s135 = sphi 0, %s134
      %s151 = sphi 0, %s135
      %s157 = sphi 0, %s159
      %s160 = sphi 0, %s157
      %s161 = sphi 0, %s160
      %s177 = sphi 0, %s161
      %s183 = sphi 0, %s185
      %s186 = sphi 0, %s183
      %s187 = sphi 0, %s186
      %s203 = sphi 0, %s187
      %s209 = sphi 0, %s211
      %s212 = sphi 0, %s209
      %s213 = sphi 0, %s212
      %s229 = sphi 0, %s213
      %s235 = sphi 0, %s237
      %s238 = sphi 0, %s235
      %s239 = sphi 0, %s238
      %s255 = sphi 0, %s239
      %s261 = sphi 0, %s263
      %s264 = sphi 0, %s261
      %s265 = sphi 0, %s264
      %s281 = sphi 0, %s265
      %s287 = sphi 0, %s289
      %s290 = sphi 0, %s287
      %s291 = sphi 0, %s290
      %s307 = sphi 0, %s291
      %s313 = sphi 0, %s315
      %s316 = sphi 0, %s313
      %s317 = sphi 0, %s316
      %s333 = sphi 0, %s317
      %s339 = sphi 0, %s341
      %s342 = sphi 0, %s339
      %s343 = sphi 0, %s342
      %s359 = sphi 0, %s343
      %s365 = sphi 0, %s367
      %s368 = sphi 0, %s365
      %s369 = sphi 0, %s368
      %s385 = sphi 0, %s369
      %s391 = sphi 0, %s393
      %s394 = sphi 0, %s391
      %s395 = sphi 0, %s394
      %s411 = sphi 0, %s395
      %s415 = sphi 0, %s415
      %s417 = sphi 0, %s415
      %s418 = sphi 0, %s417
      %s432 = sphi 0, %s418
      %s436 = sphi 0, %s436
      %s438 = sphi 0, %s436
      %s439 = sphi 0, %s438
      %s453 = sphi 0, %s439
      %s459 = sphi 0, %s461
      %s462 = sphi 0, %s459
      %s463 = sphi 0, %s462
      %s479 = sphi 0, %s463
    $region4: #{tpu_custom_call.1} parent=1 // loop_header_branch
      %34 = sbr.rel (%p32) target = $region8
    $region5: #{tpu_custom_call.1} parent=1 // loop_body
      %s36 = ssub.s32 %s31, 1
      %s37 = ssub.s32 %s31, 2
      %s44 = sadd.s32 1, %s39
      %p45 = scmp.ge.s32.totalorder %s44, 2
      %s46 = scalar_select %p45, 0, %s44
      %s47 = sadd.s32 1, %s38
      %s48 = scalar_select %p45, %s47, %s38
      %p49 = scmp.ge.s32.totalorder %s48, 2
      %s50 = scalar_select %p49, 0, %s48
      %s51 = ssub.s32 %s38, %s50
      %p52 = scmp.eq.s32.totalorder %s51, 0
      %s54 = sadd.s32 %s53, 1
      %s55 = scalar_select %p52, %s53, %s54
      %p58 = pneg %p52
      %p59 = scmp.eq.s32.totalorder %s31, 3
      %p60 = por %p58, %p59
      %p61 = scmp.ne.s32.totalorder %s53, %s56
      %p62 = scmp.eq.s32.totalorder %s31, 0
      %p63 = por %p61, %p62
      %p64 = scmp.ne.s32.totalorder %s53, %s56
      %p65 = scmp.eq.s32.totalorder %s36, 3
      %p66 = por %p64, %p65
      %p67 = scmp.ne.s32.totalorder %s56, %s57
      %p68 = scmp.eq.s32.totalorder %s36, 0
      %p69 = por %p67, %p68
      %p70 = scmp.ne.s32.totalorder %s56, %s57
      %p71 = scmp.eq.s32.totalorder %s37, 3
      %p72 = por %p70, %p71
      %p74 = scmp.ne.s32.totalorder %s57, %s73
      %p75 = scmp.eq.s32.totalorder %s37, 0
      %p76 = por %p74, %p75
      %s77 = ssub.s32 %s39, %s46
      %p78 = scmp.eq.s32.totalorder %s77, 0
      %s80 = sadd.s32 %s79, 1
      %s81 = scalar_select %p78, %s79, %s80
      %p84 = pneg %p78
      %p85 = scmp.eq.s32.totalorder %s31, 3
      %p86 = por %p84, %p85
      %p87 = scmp.ne.s32.totalorder %s79, %s82
      %p88 = scmp.eq.s32.totalorder %s31, 0
      %p89 = por %p87, %p88
      %p90 = scmp.ne.s32.totalorder %s79, %s82
      %p91 = scmp.eq.s32.totalorder %s36, 3
      %p92 = por %p90, %p91
      %p93 = scmp.ne.s32.totalorder %s82, %s83
      %p94 = scmp.eq.s32.totalorder %s36, 0
      %p95 = por %p93, %p94
      %p96 = scmp.ne.s32.totalorder %s82, %s83
      %p97 = scmp.eq.s32.totalorder %s37, 3
      %p98 = por %p96, %p97
      %p100 = scmp.ne.s32.totalorder %s83, %s99
      %p101 = scmp.eq.s32.totalorder %s37, 0
      %p102 = por %p100, %p101
      %s103 = ssub.s32 %s39, %s46
      %p104 = scmp.eq.s32.totalorder %s103, 0
      %s106 = sadd.s32 %s105, 1
      %s107 = scalar_select %p104, %s105, %s106
      %p110 = pneg %p104
      %p111 = scmp.eq.s32.totalorder %s31, 3
      %p112 = por %p110, %p111
      %p113 = scmp.ne.s32.totalorder %s105, %s108
      %p114 = scmp.eq.s32.totalorder %s31, 0
      %p115 = por %p113, %p114
      %p116 = scmp.ne.s32.totalorder %s105, %s108
      %p117 = scmp.eq.s32.totalorder %s36, 3
      %p118 = por %p116, %p117
      %p119 = scmp.ne.s32.totalorder %s108, %s109
      %p120 = scmp.eq.s32.totalorder %s36, 0
      %p121 = por %p119, %p120
      %p122 = scmp.ne.s32.totalorder %s108, %s109
      %p123 = scmp.eq.s32.totalorder %s37, 3
      %p124 = por %p122, %p123
      %p126 = scmp.ne.s32.totalorder %s109, %s125
      %p127 = scmp.eq.s32.totalorder %s37, 0
      %p128 = por %p126, %p127
      %s129 = ssub.s32 %s39, %s46
      %p130 = scmp.eq.s32.totalorder %s129, 0
      %s132 = sadd.s32 %s131, 1
      %s133 = scalar_select %p130, %s131, %s132
      %p136 = pneg %p130
      %p137 = scmp.eq.s32.totalorder %s31, 3
      %p138 = por %p136, %p137
      %p139 = scmp.ne.s32.totalorder %s131, %s134
      %p140 = scmp.eq.s32.totalorder %s31, 0
      %p141 = por %p139, %p140
      %p142 = scmp.ne.s32.totalorder %s131, %s134
      %p143 = scmp.eq.s32.totalorder %s36, 3
      %p144 = por %p142, %p143
      %p145 = scmp.ne.s32.totalorder %s134, %s135
      %p146 = scmp.eq.s32.totalorder %s36, 0
      %p147 = por %p145, %p146
      %p148 = scmp.ne.s32.totalorder %s134, %s135
      %p149 = scmp.eq.s32.totalorder %s37, 3
      %p150 = por %p148, %p149
      %p152 = scmp.ne.s32.totalorder %s135, %s151
      %p153 = scmp.eq.s32.totalorder %s37, 0
      %p154 = por %p152, %p153
      %s155 = ssub.s32 %s39, %s46
      %p156 = scmp.eq.s32.totalorder %s155, 0
      %s158 = sadd.s32 %s157, 1
      %s159 = scalar_select %p156, %s157, %s158
      %p162 = pneg %p156
      %p163 = scmp.eq.s32.totalorder %s31, 3
      %p164 = por %p162, %p163
      %p165 = scmp.ne.s32.totalorder %s157, %s160
      %p166 = scmp.eq.s32.totalorder %s31, 0
      %p167 = por %p165, %p166
      %p168 = scmp.ne.s32.totalorder %s157, %s160
      %p169 = scmp.eq.s32.totalorder %s36, 3
      %p170 = por %p168, %p169
      %p171 = scmp.ne.s32.totalorder %s160, %s161
      %p172 = scmp.eq.s32.totalorder %s36, 0
      %p173 = por %p171, %p172
      %p174 = scmp.ne.s32.totalorder %s160, %s161
      %p175 = scmp.eq.s32.totalorder %s37, 3
      %p176 = por %p174, %p175
      %p178 = scmp.ne.s32.totalorder %s161, %s177
      %p179 = scmp.eq.s32.totalorder %s37, 0
      %p180 = por %p178, %p179
      %s181 = ssub.s32 %s39, %s46
      %p182 = scmp.eq.s32.totalorder %s181, 0
      %s184 = sadd.s32 %s183, 1
      %s185 = scalar_select %p182, %s183, %s184
      %p188 = pneg %p182
      %p189 = scmp.eq.s32.totalorder %s31, 3
      %p190 = por %p188, %p189
      %p191 = scmp.ne.s32.totalorder %s183, %s186
      %p192 = scmp.eq.s32.totalorder %s31, 0
      %p193 = por %p191, %p192
      %p194 = scmp.ne.s32.totalorder %s183, %s186
      %p195 = scmp.eq.s32.totalorder %s36, 3
      %p196 = por %p194, %p195
      %p197 = scmp.ne.s32.totalorder %s186, %s187
      %p198 = scmp.eq.s32.totalorder %s36, 0
      %p199 = por %p197, %p198
      %p200 = scmp.ne.s32.totalorder %s186, %s187
      %p201 = scmp.eq.s32.totalorder %s37, 3
      %p202 = por %p200, %p201
      %p204 = scmp.ne.s32.totalorder %s187, %s203
      %p205 = scmp.eq.s32.totalorder %s37, 0
      %p206 = por %p204, %p205
      %s207 = ssub.s32 %s39, %s46
      %p208 = scmp.eq.s32.totalorder %s207, 0
      %s210 = sadd.s32 %s209, 1
      %s211 = scalar_select %p208, %s209, %s210
      %p214 = pneg %p208
      %p215 = scmp.eq.s32.totalorder %s31, 3
      %p216 = por %p214, %p215
      %p217 = scmp.ne.s32.totalorder %s209, %s212
      %p218 = scmp.eq.s32.totalorder %s31, 0
      %p219 = por %p217, %p218
      %p220 = scmp.ne.s32.totalorder %s209, %s212
      %p221 = scmp.eq.s32.totalorder %s36, 3
      %p222 = por %p220, %p221
      %p223 = scmp.ne.s32.totalorder %s212, %s213
      %p224 = scmp.eq.s32.totalorder %s36, 0
      %p225 = por %p223, %p224
      %p226 = scmp.ne.s32.totalorder %s212, %s213
      %p227 = scmp.eq.s32.totalorder %s37, 3
      %p228 = por %p226, %p227
      %p230 = scmp.ne.s32.totalorder %s213, %s229
      %p231 = scmp.eq.s32.totalorder %s37, 0
      %p232 = por %p230, %p231
      %s233 = ssub.s32 %s39, %s46
      %p234 = scmp.eq.s32.totalorder %s233, 0
      %s236 = sadd.s32 %s235, 1
      %s237 = scalar_select %p234, %s235, %s236
      %p240 = pneg %p234
      %p241 = scmp.eq.s32.totalorder %s31, 3
      %p242 = por %p240, %p241
      %p243 = scmp.ne.s32.totalorder %s235, %s238
      %p244 = scmp.eq.s32.totalorder %s31, 0
      %p245 = por %p243, %p244
      %p246 = scmp.ne.s32.totalorder %s235, %s238
      %p247 = scmp.eq.s32.totalorder %s36, 3
      %p248 = por %p246, %p247
      %p249 = scmp.ne.s32.totalorder %s238, %s239
      %p250 = scmp.eq.s32.totalorder %s36, 0
      %p251 = por %p249, %p250
      %p252 = scmp.ne.s32.totalorder %s238, %s239
      %p253 = scmp.eq.s32.totalorder %s37, 3
      %p254 = por %p252, %p253
      %p256 = scmp.ne.s32.totalorder %s239, %s255
      %p257 = scmp.eq.s32.totalorder %s37, 0
      %p258 = por %p256, %p257
      %s259 = ssub.s32 %s39, %s46
      %p260 = scmp.eq.s32.totalorder %s259, 0
      %s262 = sadd.s32 %s261, 1
      %s263 = scalar_select %p260, %s261, %s262
      %p266 = pneg %p260
      %p267 = scmp.eq.s32.totalorder %s31, 3
      %p268 = por %p266, %p267
      %p269 = scmp.ne.s32.totalorder %s261, %s264
      %p270 = scmp.eq.s32.totalorder %s31, 0
      %p271 = por %p269, %p270
      %p272 = scmp.ne.s32.totalorder %s261, %s264
      %p273 = scmp.eq.s32.totalorder %s36, 3
      %p274 = por %p272, %p273
      %p275 = scmp.ne.s32.totalorder %s264, %s265
      %p276 = scmp.eq.s32.totalorder %s36, 0
      %p277 = por %p275, %p276
      %p278 = scmp.ne.s32.totalorder %s264, %s265
      %p279 = scmp.eq.s32.totalorder %s37, 3
      %p280 = por %p278, %p279
      %p282 = scmp.ne.s32.totalorder %s265, %s281
      %p283 = scmp.eq.s32.totalorder %s37, 0
      %p284 = por %p282, %p283
      %s285 = ssub.s32 %s39, %s46
      %p286 = scmp.eq.s32.totalorder %s285, 0
      %s288 = sadd.s32 %s287, 1
      %s289 = scalar_select %p286, %s287, %s288
      %p292 = pneg %p286
      %p293 = scmp.eq.s32.totalorder %s31, 3
      %p294 = por %p292, %p293
      %p295 = scmp.ne.s32.totalorder %s287, %s290
      %p296 = scmp.eq.s32.totalorder %s31, 0
      %p297 = por %p295, %p296
      %p298 = scmp.ne.s32.totalorder %s287, %s290
      %p299 = scmp.eq.s32.totalorder %s36, 3
      %p300 = por %p298, %p299
      %p301 = scmp.ne.s32.totalorder %s290, %s291
      %p302 = scmp.eq.s32.totalorder %s36, 0
      %p303 = por %p301, %p302
      %p304 = scmp.ne.s32.totalorder %s290, %s291
      %p305 = scmp.eq.s32.totalorder %s37, 3
      %p306 = por %p304, %p305
      %p308 = scmp.ne.s32.totalorder %s291, %s307
      %p309 = scmp.eq.s32.totalorder %s37, 0
      %p310 = por %p308, %p309
      %s311 = ssub.s32 %s39, %s46
      %p312 = scmp.eq.s32.totalorder %s311, 0
      %s314 = sadd.s32 %s313, 1
      %s315 = scalar_select %p312, %s313, %s314
      %p318 = pneg %p312
      %p319 = scmp.eq.s32.totalorder %s31, 3
      %p320 = por %p318, %p319
      %p321 = scmp.ne.s32.totalorder %s313, %s316
      %p322 = scmp.eq.s32.totalorder %s31, 0
      %p323 = por %p321, %p322
      %p324 = scmp.ne.s32.totalorder %s313, %s316
      %p325 = scmp.eq.s32.totalorder %s36, 3
      %p326 = por %p324, %p325
      %p327 = scmp.ne.s32.totalorder %s316, %s317
      %p328 = scmp.eq.s32.totalorder %s36, 0
      %p329 = por %p327, %p328
      %p330 = scmp.ne.s32.totalorder %s316, %s317
      %p331 = scmp.eq.s32.totalorder %s37, 3
      %p332 = por %p330, %p331
      %p334 = scmp.ne.s32.totalorder %s317, %s333
      %p335 = scmp.eq.s32.totalorder %s37, 0
      %p336 = por %p334, %p335
      %s337 = ssub.s32 %s39, %s46
      %p338 = scmp.eq.s32.totalorder %s337, 0
      %s340 = sadd.s32 %s339, 1
      %s341 = scalar_select %p338, %s339, %s340
      %p344 = pneg %p338
      %p345 = scmp.eq.s32.totalorder %s31, 3
      %p346 = por %p344, %p345
      %p347 = scmp.ne.s32.totalorder %s339, %s342
      %p348 = scmp.eq.s32.totalorder %s31, 0
      %p349 = por %p347, %p348
      %p350 = scmp.ne.s32.totalorder %s339, %s342
      %p351 = scmp.eq.s32.totalorder %s36, 3
      %p352 = por %p350, %p351
      %p353 = scmp.ne.s32.totalorder %s342, %s343
      %p354 = scmp.eq.s32.totalorder %s36, 0
      %p355 = por %p353, %p354
      %p356 = scmp.ne.s32.totalorder %s342, %s343
      %p357 = scmp.eq.s32.totalorder %s37, 3
      %p358 = por %p356, %p357
      %p360 = scmp.ne.s32.totalorder %s343, %s359
      %p361 = scmp.eq.s32.totalorder %s37, 0
      %p362 = por %p360, %p361
      %s363 = ssub.s32 %s39, %s46
      %p364 = scmp.eq.s32.totalorder %s363, 0
      %s366 = sadd.s32 %s365, 1
      %s367 = scalar_select %p364, %s365, %s366
      %p370 = pneg %p364
      %p371 = scmp.eq.s32.totalorder %s31, 3
      %p372 = por %p370, %p371
      %p373 = scmp.ne.s32.totalorder %s365, %s368
      %p374 = scmp.eq.s32.totalorder %s31, 0
      %p375 = por %p373, %p374
      %p376 = scmp.ne.s32.totalorder %s365, %s368
      %p377 = scmp.eq.s32.totalorder %s36, 3
      %p378 = por %p376, %p377
      %p379 = scmp.ne.s32.totalorder %s368, %s369
      %p380 = scmp.eq.s32.totalorder %s36, 0
      %p381 = por %p379, %p380
      %p382 = scmp.ne.s32.totalorder %s368, %s369
      %p383 = scmp.eq.s32.totalorder %s37, 3
      %p384 = por %p382, %p383
      %p386 = scmp.ne.s32.totalorder %s369, %s385
      %p387 = scmp.eq.s32.totalorder %s37, 0
      %p388 = por %p386, %p387
      %s389 = ssub.s32 %s39, %s46
      %p390 = scmp.eq.s32.totalorder %s389, 0
      %s392 = sadd.s32 %s391, 1
      %s393 = scalar_select %p390, %s391, %s392
      %p396 = pneg %p390
      %p397 = scmp.eq.s32.totalorder %s31, 3
      %p398 = por %p396, %p397
      %p399 = scmp.ne.s32.totalorder %s391, %s394
      %p400 = scmp.eq.s32.totalorder %s31, 0
      %p401 = por %p399, %p400
      %p402 = scmp.ne.s32.totalorder %s391, %s394
      %p403 = scmp.eq.s32.totalorder %s36, 3
      %p404 = por %p402, %p403
      %p405 = scmp.ne.s32.totalorder %s394, %s395
      %p406 = scmp.eq.s32.totalorder %s36, 0
      %p407 = por %p405, %p406
      %p408 = scmp.ne.s32.totalorder %s394, %s395
      %p409 = scmp.eq.s32.totalorder %s37, 3
      %p410 = por %p408, %p409
      %p412 = scmp.ne.s32.totalorder %s395, %s411
      %p413 = scmp.eq.s32.totalorder %s37, 0
      %p414 = por %p412, %p413
      %s416 = sadd.s32 %s415, 1
      %p419 = scmp.eq.s32.totalorder %s31, 3
      %p420 = scmp.ne.s32.totalorder %s415, %s417
      %p421 = scmp.eq.s32.totalorder %s31, 0
      %p422 = por %p420, %p421
      %p423 = scmp.ne.s32.totalorder %s415, %s417
      %p424 = scmp.eq.s32.totalorder %s36, 3
      %p425 = por %p423, %p424
      %p426 = scmp.ne.s32.totalorder %s417, %s418
      %p427 = scmp.eq.s32.totalorder %s36, 0
      %p428 = por %p426, %p427
      %p429 = scmp.ne.s32.totalorder %s417, %s418
      %p430 = scmp.eq.s32.totalorder %s37, 3
      %p431 = por %p429, %p430
      %p433 = scmp.ne.s32.totalorder %s418, %s432
      %p434 = scmp.eq.s32.totalorder %s37, 0
      %p435 = por %p433, %p434
      %s437 = sadd.s32 %s436, 1
      %p440 = scmp.eq.s32.totalorder %s31, 3
      %p441 = scmp.ne.s32.totalorder %s436, %s438
      %p442 = scmp.eq.s32.totalorder %s31, 0
      %p443 = por %p441, %p442
      %p444 = scmp.ne.s32.totalorder %s436, %s438
      %p445 = scmp.eq.s32.totalorder %s36, 3
      %p446 = por %p444, %p445
      %p447 = scmp.ne.s32.totalorder %s438, %s439
      %p448 = scmp.eq.s32.totalorder %s36, 0
      %p449 = por %p447, %p448
      %p450 = scmp.ne.s32.totalorder %s438, %s439
      %p451 = scmp.eq.s32.totalorder %s37, 3
      %p452 = por %p450, %p451
      %p454 = scmp.ne.s32.totalorder %s439, %s453
      %p455 = scmp.eq.s32.totalorder %s37, 0
      %p456 = por %p454, %p455
      %s457 = ssub.s32 %s38, %s50
      %p458 = scmp.eq.s32.totalorder %s457, 0
      %s460 = sadd.s32 %s459, 1
      %s461 = scalar_select %p458, %s459, %s460
      %p464 = pneg %p458
      %p465 = scmp.eq.s32.totalorder %s31, 3
      %p466 = por %p464, %p465
      %p467 = scmp.ne.s32.totalorder %s459, %s462
      %p468 = scmp.eq.s32.totalorder %s31, 0
      %p469 = por %p467, %p468
      %p470 = scmp.ne.s32.totalorder %s459, %s462
      %p471 = scmp.eq.s32.totalorder %s36, 3
      %p472 = por %p470, %p471
      %p473 = scmp.ne.s32.totalorder %s462, %s463
      %p474 = scmp.eq.s32.totalorder %s36, 0
      %p475 = por %p473, %p474
      %p476 = scmp.ne.s32.totalorder %s462, %s463
      %p477 = scmp.eq.s32.totalorder %s37, 3
      %p478 = por %p476, %p477
      %p480 = scmp.ne.s32.totalorder %s463, %s479
      %p481 = scmp.eq.s32.totalorder %s37, 0
      %p482 = por %p480, %p481
      %p483 = scmp.le.s32.totalorder 1, %s31
      %p484 = scmp.lt.s32.totalorder %s31, 5
      %p485 = pnand %p483, %p484
      %p486 = pneg %p485
      // Predicated region
      $region9: #{tpu_custom_call.1} parent=5 // pred_check
        _
      $region10: #{tpu_custom_call.1} parent=5 // pred_check_branch
        %488 = sbr.rel (%p485) target = $region12
      $region11: #{tpu_custom_call.1} parent=5 // pred_region
        %s489 = ssub.s32 %s31, 1
        // Predicated region
        $region13: #{tpu_custom_call.1} parent=11 // pred_check
          %p490 = pneg %p428
        $region14: #{tpu_custom_call.1} parent=11 // pred_check_branch
          %492 = sbr.rel (%p490) target = $region16
        $region15: #{tpu_custom_call.1} parent=11 // pred_region
          _
        $region16: #{tpu_custom_call.1} parent=11 // pred_fallthru
          _
        // Predicated region
        $region17: #{tpu_custom_call.1} parent=11 // pred_check
          %p493 = pneg %p449
        $region18: #{tpu_custom_call.1} parent=11 // pred_check_branch
          %495 = sbr.rel (%p493) target = $region20
        $region19: #{tpu_custom_call.1} parent=11 // pred_region
          _
        $region20: #{tpu_custom_call.1} parent=11 // pred_fallthru
          _
      $region12: #{tpu_custom_call.1} parent=5 // pred_fallthru
        _
      %p496 = scmp.lt.s32.totalorder %s31, 4
      // Predicated region
      $region21: #{tpu_custom_call.1} parent=5 // pred_check
        %p497 = pneg %p496
      $region22: #{tpu_custom_call.1} parent=5 // pred_check_branch
        %499 = sbr.rel (%p497) target = $region24
      $region23: #{tpu_custom_call.1} parent=5 // pred_region
        // Predicated region
        $region25: #{tpu_custom_call.1} parent=23 // pred_check
          %p500 = pneg %p63
        $region26: #{tpu_custom_call.1} parent=23 // pred_check_branch
          %502 = sbr.rel (%p500) target = $region28
        $region27: #{tpu_custom_call.1} parent=23 // pred_region
          %s503 = sand.u32 %s53, 1
          %s504 = scalar_lea.sflag [#allocation3], %s503
          %s505 = sand.u32 %s53, 1
          %s506 = smul.addr %s505, 8
          %s507 = scalar_lea.vmem [#allocation2], %s506
          %s509 = ssub.s32 128, 128
          %510 = vsyncadd %s504, %s509
          %s511 = smul.addr %s38, 128
          %s512 = scalar_lea.hbm %s0, %s511
          %s514 = sshll.u32 %s507, 4
          %s515 = int_to_ptr.vmem [resolvable:$true] %s514
          %517 = dma.hbm_to_vmem [thread:$0]  %s512, 128, %s515, %s504
        $region28: #{tpu_custom_call.1} parent=23 // pred_fallthru
          _
        // Predicated region
        $region29: #{tpu_custom_call.1} parent=23 // pred_check
          %p518 = pneg %p89
        $region30: #{tpu_custom_call.1} parent=23 // pred_check_branch
          %520 = sbr.rel (%p518) target = $region32
        $region31: #{tpu_custom_call.1} parent=23 // pred_region
          %s521 = sand.u32 %s79, 1
          %s522 = scalar_lea.sflag [#allocation6], %s521
          %s523 = sand.u32 %s79, 1
          %s524 = scalar_lea.vmem [#allocation5], %s523
          %s526 = ssub.s32 16, 16
          %527 = vsyncadd %s522, %s526
          %s528 = smul.addr %s39, 16
          %s529 = scalar_lea.hbm %s1, %s528
          %s531 = sshll.u32 %s524, 4
          %s532 = int_to_ptr.vmem [resolvable:$true] %s531
          %534 = dma.hbm_to_vmem [thread:$0]  %s529, 16, %s532, %s522
        $region32: #{tpu_custom_call.1} parent=23 // pred_fallthru
          _
        // Predicated region
        $region33: #{tpu_custom_call.1} parent=23 // pred_check
          %p535 = pneg %p115
        $region34: #{tpu_custom_call.1} parent=23 // pred_check_branch
          %537 = sbr.rel (%p535) target = $region36
        $region35: #{tpu_custom_call.1} parent=23 // pred_region
          %p538 = scmp.lt.s32.totalorder %s39, 1
          %s539 = scalar_select %p538, %s39, 1
          %s540 = scalar_lea.vmem %s2, %s539
        $region36: #{tpu_custom_call.1} parent=23 // pred_fallthru
          _
        // Predicated region
        $region37: #{tpu_custom_call.1} parent=23 // pred_check
          %p541 = pneg %p141
        $region38: #{tpu_custom_call.1} parent=23 // pred_check_branch
          %543 = sbr.rel (%p541) target = $region40
        $region39: #{tpu_custom_call.1} parent=23 // pred_region
          %p544 = scmp.lt.s32.totalorder %s39, 1
          %s545 = scalar_select %p544, %s39, 1
          %s546 = smul.addr %s545, 4
          %s547 = smul.addr %s546, 4
          %s548 = scalar_lea.vmem %s3, %s547
        $region40: #{tpu_custom_call.1} parent=23 // pred_fallthru
          _
        // Predicated region
        $region41: #{tpu_custom_call.1} parent=23 // pred_check
          %p549 = pneg %p167
        $region42: #{tpu_custom_call.1} parent=23 // pred_check_branch
          %551 = sbr.rel (%p549) target = $region44
        $region43: #{tpu_custom_call.1} parent=23 // pred_region
          %p552 = scmp.lt.s32.totalorder %s39, 1
          %s553 = scalar_select %p552, %s39, 1
          %s554 = smul.addr %s553, 4
          %s555 = smul.addr %s554, 4
          %s556 = scalar_lea.vmem %s4, %s555
        $region44: #{tpu_custom_call.1} parent=23 // pred_fallthru
          _
        // Predicated region
        $region45: #{tpu_custom_call.1} parent=23 // pred_check
          %p557 = pneg %p193
        $region46: #{tpu_custom_call.1} parent=23 // pred_check_branch
          %559 = sbr.rel (%p557) target = $region48
        $region47: #{tpu_custom_call.1} parent=23 // pred_region
          %p560 = scmp.lt.s32.totalorder %s39, 1
          %s561 = scalar_select %p560, %s39, 1
          %s562 = smul.addr %s561, 4
          %s563 = smul.addr %s562, 4
          %s564 = scalar_lea.vmem %s5, %s563
        $region48: #{tpu_custom_call.1} parent=23 // pred_fallthru
          _
        // Predicated region
        $region49: #{tpu_custom_call.1} parent=23 // pred_check
          %p565 = pneg %p219
        $region50: #{tpu_custom_call.1} parent=23 // pred_check_branch
          %567 = sbr.rel (%p565) target = $region52
        $region51: #{tpu_custom_call.1} parent=23 // pred_region
          %p568 = scmp.lt.s32.totalorder %s39, 1
          %s569 = scalar_select %p568, %s39, 1
          %s570 = smul.addr %s569, 4
          %s571 = smul.addr %s570, 4
          %s572 = scalar_lea.vmem %s6, %s571
        $region52: #{tpu_custom_call.1} parent=23 // pred_fallthru
          _
        // Predicated region
        $region53: #{tpu_custom_call.1} parent=23 // pred_check
          %p573 = pneg %p245
        $region54: #{tpu_custom_call.1} parent=23 // pred_check_branch
          %575 = sbr.rel (%p573) target = $region56
        $region55: #{tpu_custom_call.1} parent=23 // pred_region
          %p576 = scmp.lt.s32.totalorder %s39, 1
          %s577 = scalar_select %p576, %s39, 1
          %s578 = scalar_lea.vmem %s7, %s577
        $region56: #{tpu_custom_call.1} parent=23 // pred_fallthru
          _
        // Predicated region
        $region57: #{tpu_custom_call.1} parent=23 // pred_check
          %p579 = pneg %p271
        $region58: #{tpu_custom_call.1} parent=23 // pred_check_branch
          %581 = sbr.rel (%p579) target = $region60
        $region59: #{tpu_custom_call.1} parent=23 // pred_region
          %p582 = scmp.lt.s32.totalorder %s39, 1
          %s583 = scalar_select %p582, %s39, 1
          %s584 = scalar_lea.vmem %s8, %s583
        $region60: #{tpu_custom_call.1} parent=23 // pred_fallthru
          _
        // Predicated region
        $region61: #{tpu_custom_call.1} parent=23 // pred_check
          %p585 = pneg %p297
        $region62: #{tpu_custom_call.1} parent=23 // pred_check_branch
          %587 = sbr.rel (%p585) target = $region64
        $region63: #{tpu_custom_call.1} parent=23 // pred_region
          %p588 = scmp.lt.s32.totalorder %s39, 1
          %s589 = scalar_select %p588, %s39, 1
          %s590 = scalar_lea.vmem %s9, %s589
        $region64: #{tpu_custom_call.1} parent=23 // pred_fallthru
          _
        // Predicated region
        $region65: #{tpu_custom_call.1} parent=23 // pred_check
          %p591 = pneg %p323
        $region66: #{tpu_custom_call.1} parent=23 // pred_check_branch
          %593 = sbr.rel (%p591) target = $region68
        $region67: #{tpu_custom_call.1} parent=23 // pred_region
          %p594 = scmp.lt.s32.totalorder %s39, 1
          %s595 = scalar_select %p594, %s39, 1
          %s596 = smul.addr %s595, 4
          %s597 = smul.addr %s596, 4
          %s598 = scalar_lea.vmem %s10, %s597
        $region68: #{tpu_custom_call.1} parent=23 // pred_fallthru
          _
        // Predicated region
        $region69: #{tpu_custom_call.1} parent=23 // pred_check
          %p599 = pneg %p349
        $region70: #{tpu_custom_call.1} parent=23 // pred_check_branch
          %601 = sbr.rel (%p599) target = $region72
        $region71: #{tpu_custom_call.1} parent=23 // pred_region
          %p602 = scmp.lt.s32.totalorder %s39, 1
          %s603 = scalar_select %p602, %s39, 1
          %s604 = scalar_lea.vmem %s11, %s603
        $region72: #{tpu_custom_call.1} parent=23 // pred_fallthru
          _
        // Predicated region
        $region73: #{tpu_custom_call.1} parent=23 // pred_check
          %p605 = pneg %p375
        $region74: #{tpu_custom_call.1} parent=23 // pred_check_branch
          %607 = sbr.rel (%p605) target = $region76
        $region75: #{tpu_custom_call.1} parent=23 // pred_region
          %p608 = scmp.lt.s32.totalorder %s39, 1
          %s609 = scalar_select %p608, %s39, 1
          %s610 = smul.addr %s609, 16
          %s611 = smul.addr %s610, 4
          %s612 = scalar_lea.vmem %s12, %s611
        $region76: #{tpu_custom_call.1} parent=23 // pred_fallthru
          _
        // Predicated region
        $region77: #{tpu_custom_call.1} parent=23 // pred_check
          %p613 = pneg %p401
        $region78: #{tpu_custom_call.1} parent=23 // pred_check_branch
          %615 = sbr.rel (%p613) target = $region80
        $region79: #{tpu_custom_call.1} parent=23 // pred_region
          %p616 = scmp.lt.s32.totalorder %s39, 1
          %s617 = scalar_select %p616, %s39, 1
          %s618 = scalar_lea.vmem %s13, %s617
        $region80: #{tpu_custom_call.1} parent=23 // pred_fallthru
          _
      $region24: #{tpu_custom_call.1} parent=5 // pred_fallthru
        _
      %p619 = scmp.le.s32.totalorder 1, %s31
      %p620 = scmp.lt.s32.totalorder %s31, 5
      %p621 = pnand %p619, %p620
      %p622 = pneg %p621
      // Predicated region
      $region81: #{tpu_custom_call.1} parent=5 // pred_check
        _
      $region82: #{tpu_custom_call.1} parent=5 // pred_check_branch
        %624 = sbr.rel (%p621) target = $region84
      $region83: #{tpu_custom_call.1} parent=5 // pred_region
        %s625 = ssub.s32 %s31, 1
        %s626 = sand.u32 %s56, 1
        %s627 = scalar_lea.sflag [#allocation3], %s626
        %s628 = sand.u32 %s56, 1
        %s629 = smul.addr %s628, 8
        %s630 = scalar_lea.vmem [#allocation2], %s629
        // Predicated region
        $region85: #{tpu_custom_call.1} parent=83 // pred_check
          %p631 = pneg %p69
        $region86: #{tpu_custom_call.1} parent=83 // pred_check_branch
          %633 = sbr.rel (%p631) target = $region88
        $region87: #{tpu_custom_call.1} parent=83 // pred_region
          %634 = dma.done %s627, 128
        $region88: #{tpu_custom_call.1} parent=83 // pred_fallthru
          _
        %s635 = sand.u32 %s82, 1
        %s636 = scalar_lea.sflag [#allocation6], %s635
        %s637 = sand.u32 %s82, 1
        %s638 = scalar_lea.vmem [#allocation5], %s637
        // Predicated region
        $region89: #{tpu_custom_call.1} parent=83 // pred_check
          %p639 = pneg %p95
        $region90: #{tpu_custom_call.1} parent=83 // pred_check_branch
          %641 = sbr.rel (%p639) target = $region92
        $region91: #{tpu_custom_call.1} parent=83 // pred_region
          %642 = dma.done %s636, 16
        $region92: #{tpu_custom_call.1} parent=83 // pred_fallthru
          _
        %s643 = sand.u32 %s56, 1
        %s644 = scalar_lea.sflag [#allocation3], %s643
        %s645 = sand.u32 %s56, 1
        %s646 = smul.addr %s645, 8
        %s647 = scalar_lea.vmem [#allocation2], %s646
        %p648 = pneg %p69
        %p649 = pneg %p66
        %s650 = sand.u32 %s82, 1
        %s651 = scalar_lea.sflag [#allocation6], %s650
        %s652 = sand.u32 %s82, 1
        %s653 = scalar_lea.vmem [#allocation5], %s652
        %p654 = pneg %p95
        %p655 = pneg %p92
        %p656 = scmp.lt.s32.totalorder %s41, 1
        %s657 = scalar_select %p656, %s41, 1
        %s658 = scalar_lea.vmem %s2, %s657
        %p659 = pneg %p121
        %p660 = pneg %p118
        %p661 = scmp.lt.s32.totalorder %s41, 1
        %s662 = scalar_select %p661, %s41, 1
        %s663 = smul.addr %s662, 4
        %s664 = smul.addr %s663, 4
        %s665 = scalar_lea.vmem %s3, %s664
        %p666 = pneg %p147
        %p667 = pneg %p144
        %p668 = scmp.lt.s32.totalorder %s41, 1
        %s669 = scalar_select %p668, %s41, 1
        %s670 = smul.addr %s669, 4
        %s671 = smul.addr %s670, 4
        %s672 = scalar_lea.vmem %s4, %s671
        %p673 = pneg %p173
        %p674 = pneg %p170
        %p675 = scmp.lt.s32.totalorder %s41, 1
        %s676 = scalar_select %p675, %s41, 1
        %s677 = smul.addr %s676, 4
        %s678 = smul.addr %s677, 4
        %s679 = scalar_lea.vmem %s5, %s678
        %p680 = pneg %p199
        %p681 = pneg %p196
        %p682 = scmp.lt.s32.totalorder %s41, 1
        %s683 = scalar_select %p682, %s41, 1
        %s684 = smul.addr %s683, 4
        %s685 = smul.addr %s684, 4
        %s686 = scalar_lea.vmem %s6, %s685
        %p687 = pneg %p225
        %p688 = pneg %p222
        %p689 = scmp.lt.s32.totalorder %s41, 1
        %s690 = scalar_select %p689, %s41, 1
        %s691 = scalar_lea.vmem %s7, %s690
        %p692 = pneg %p251
        %p693 = pneg %p248
        %p694 = scmp.lt.s32.totalorder %s41, 1
        %s695 = scalar_select %p694, %s41, 1
        %s696 = scalar_lea.vmem %s8, %s695
        %p697 = pneg %p277
        %p698 = pneg %p274
        %p699 = scmp.lt.s32.totalorder %s41, 1
        %s700 = scalar_select %p699, %s41, 1
        %s701 = scalar_lea.vmem %s9, %s700
        %p702 = pneg %p303
        %p703 = pneg %p300
        %p704 = scmp.lt.s32.totalorder %s41, 1
        %s705 = scalar_select %p704, %s41, 1
        %s706 = smul.addr %s705, 4
        %s707 = smul.addr %s706, 4
        %s708 = scalar_lea.vmem %s10, %s707
        %p709 = pneg %p329
        %p710 = pneg %p326
        %p711 = scmp.lt.s32.totalorder %s41, 1
        %s712 = scalar_select %p711, %s41, 1
        %s713 = scalar_lea.vmem %s11, %s712
        %p714 = pneg %p355
        %p715 = pneg %p352
        %p716 = scmp.lt.s32.totalorder %s41, 1
        %s717 = scalar_select %p716, %s41, 1
        %s718 = smul.addr %s717, 16
        %s719 = smul.addr %s718, 4
        %s720 = scalar_lea.vmem %s12, %s719
        %p721 = pneg %p381
        %p722 = pneg %p378
        %p723 = scmp.lt.s32.totalorder %s41, 1
        %s724 = scalar_select %p723, %s41, 1
        %s725 = scalar_lea.vmem %s13, %s724
        %p726 = pneg %p407
        %p727 = pneg %p404
        %p728 = pneg %p428
        %p729 = pneg %p425
        %p730 = pneg %p449
        %p731 = pneg %p446
        %p732 = pneg %p475
        %p733 = pneg %p472
        %s734 = sand.u32 %s462, 1
        %s735 = scalar_lea.sflag [#allocation4], %s734
        %s736 = sand.u32 %s462, 1
        %s737 = smul.addr %s736, 8
        %s738 = scalar_lea.vmem [#allocation7], %s737
        %p739 = scmp.lt.s32.totalorder %s41, 1
        %s740 = scalar_select %p739, %s41, 1
        %s741 = scalar_lea.vmem %s2, %s740
        %p742 = scmp.lt.s32.totalorder %s41, 1
        %s743 = scalar_select %p742, %s41, 1
        %s744 = smul.addr %s743, 4
        %s745 = smul.addr %s744, 4
        %s746 = scalar_lea.vmem %s3, %s745
        %p747 = scmp.lt.s32.totalorder %s41, 1
        %s748 = scalar_select %p747, %s41, 1
        %s749 = smul.addr %s748, 4
        %s750 = smul.addr %s749, 4
        %s751 = scalar_lea.vmem %s4, %s750
        %p752 = scmp.lt.s32.totalorder %s41, 1
        %s753 = scalar_select %p752, %s41, 1
        %s754 = smul.addr %s753, 4
        %s755 = smul.addr %s754, 4
        %s756 = scalar_lea.vmem %s5, %s755
        %p757 = scmp.lt.s32.totalorder %s41, 1
        %s758 = scalar_select %p757, %s41, 1
        %s759 = smul.addr %s758, 4
        %s760 = smul.addr %s759, 4
        %s761 = scalar_lea.vmem %s6, %s760
        %p762 = scmp.lt.s32.totalorder %s41, 1
        %s763 = scalar_select %p762, %s41, 1
        %s764 = scalar_lea.vmem %s7, %s763
        %p765 = scmp.lt.s32.totalorder %s41, 1
        %s766 = scalar_select %p765, %s41, 1
        %s767 = scalar_lea.vmem %s8, %s766
        %p768 = scmp.lt.s32.totalorder %s41, 1
        %s769 = scalar_select %p768, %s41, 1
        %s770 = scalar_lea.vmem %s9, %s769
        %p771 = scmp.lt.s32.totalorder %s41, 1
        %s772 = scalar_select %p771, %s41, 1
        %s773 = smul.addr %s772, 4
        %s774 = smul.addr %s773, 4
        %s775 = scalar_lea.vmem %s10, %s774
        %p776 = scmp.lt.s32.totalorder %s41, 1
        %s777 = scalar_select %p776, %s41, 1
        %s778 = scalar_lea.vmem %s11, %s777
        %p779 = scmp.lt.s32.totalorder %s41, 1
        %s780 = scalar_select %p779, %s41, 1
        %s781 = smul.addr %s780, 16
        %s782 = smul.addr %s781, 4
        %s783 = scalar_lea.vmem %s12, %s782
        %p784 = scmp.lt.s32.totalorder %s41, 1
        %s785 = scalar_select %p784, %s41, 1
        %s786 = scalar_lea.vmem %s13, %s785
        %p788 = scmp.eq.s32.totalorder %s41, 0
        // Predicated region
        $region93: #{tpu_custom_call.1} parent=83 // pred_check
          %p789 = pneg %p788
        $region94: #{tpu_custom_call.1} parent=83 // pred_check_branch
          %791 = sbr.rel (%p789) target = $region96
        $region95: #{tpu_custom_call.1} parent=83 // pred_region
          %v792 = vld [vmem:[%s630] sm:$0xff]
          %vm793 = vcmask 261120
          %794 = vst.msk [vmem:[%s738] sm:$0xff] %vm793, %v792
        $region96: #{tpu_custom_call.1} parent=83 // pred_fallthru
          _
        %v795 = vld [vmem:[%s738] sm:$0xff]
        %v796 = vld [vmem:[%s638] sm:$0x1]
        %v797 = vld [vmem:[%s741] sm:$0x1]
        %vm798 = vcmask 261120
        %v799 = vsel %vm798, %v795, 0.0
        %800 = vadd.xlane.f32.xlu0 %v799
        %v801 = vpop.xlane.xlu0 %800
        %v802 = vrcp.pop 32.0
        %v803 = vmul.f32 %v801, %v802
        %v804 = vsub.f32 %v795, %v803
        %v805 = vmul.f32 %v804, %v804
        %v806 = vsel %vm798, %v805, 0.0
        %807 = vadd.xlane.f32.xlu0 %v806
        %v808 = vpop.xlane.xlu0 %807
        %v809 = vmul.f32 %v808, %v802
        %v810 = vadd.f32 %v809, 1e-05
        %v811 = vrsqrt.pop %v810
        %v812 = vmul.f32 %v804, %v811
        %v814 = vlaneseq
        %v815 = vshrl.u32 %v814, 7
        %v816 = vsub.s32 0, %v815
        %v817 = vrot.slane %v796, %v816
        %v819 = vmul.f32 %v817, %v812
        %v821 = vlaneseq
        %v822 = vshrl.u32 %v821, 7
        %v823 = vsub.s32 0, %v822
        %v824 = vrot.slane %v797, %v823
        %v826 = vadd.f32 %v819, %v824
        %v827 = vpack.c.bf16 %v826, %v826
        %v828 = vld [vmem:[%s746] sm:$0xf]
        %v829 = vld [vmem:[%s746 + $0x4] sm:$0xf]
        %v830 = vld [vmem:[%s746 + $0x8] sm:$0xf]
        %v831 = vld [vmem:[%s746 + $0xc] sm:$0xf]
        %v836 = vunpack.c.l.b16 %v828
        %v837 = vunpack.c.l.b16 %v829
        %v838 = vunpack.c.l.b16 %v830
        %v839 = vunpack.c.l.b16 %v831
        %v840 = vpack.c.b16 %v837, %v836
        %v841 = vpack.c.b16 %v839, %v838
        %v845 = vsel %vm798, %v827, 0
        %847 = vmatprep.subr.bf16.mxu0 0
        %848 = vmatpush1.bf16.msra.mxu0 0
        %849 = vmatprep.subr.bf16.mxu0 0
        %850 = vmatpush1.bf16.msra.mxu0 0
        %851 = vmatprep.subr.bf16.mxu0 0
        %852 = vmatpush1.bf16.msra.mxu0 0
        %853 = vmatprep.subr.bf16.mxu0 0
        %854 = vmatpush1.bf16.msra.mxu0 0
        %855 = vmatprep.subr.bf16.mxu0 0
        %856 = vmatpush1.bf16.msra.mxu0 0
        %857 = vmatprep.subr.bf16.mxu0 0
        %858 = vmatpush1.bf16.msra.mxu0 0
        %859 = vmatprep.subr.bf16.mxu0 0
        %860 = vmatpush1.bf16.msra.mxu0 %v841
        %861 = vmatprep.subr.bf16.mxu0 0
        %862 = vmatpush1.bf16.msra.mxu0 %v840
        %863 = vmatprep.subr.bf16.mxu0 0
        %864 = vmatpush2.bf16.msra.mxu0 0
        %865 = vmatprep.subr.bf16.mxu0 0
        %866 = vmatpush2.bf16.msra.mxu0 0
        %867 = vmatprep.subr.bf16.mxu0 0
        %868 = vmatpush2.bf16.msra.mxu0 0
        %869 = vmatprep.subr.bf16.mxu0 0
        %870 = vmatpush2.bf16.msra.mxu0 0
        %871 = vmatprep.subr.bf16.mxu0 0
        %872 = vmatpush2.bf16.msra.mxu0 0
        %873 = vmatprep.subr.bf16.mxu0 0
        %874 = vmatpush2.bf16.msra.mxu0 0
        %875 = vmatprep.subr.bf16.mxu0 0
        %876 = vmatpush2.bf16.msra.mxu0 0
        %877 = vmatprep.subr.bf16.mxu0 0
        %878 = vmatpush2.bf16.msra.mxu0 0
        %879 = vmatprep.mubr.bf16.mxu0 0
        %880 = vmatmul.mubr.bf16.gmra.mxu0 %v845
        %v881 = vpop.f32.mrf.mxu0
        %v882 = vadd.f32 0.0, %v881
        %v883 = vpop.f32.mrf.mxu0
        %v884 = vpop.f32.mrf.mxu0
        %v885 = vpop.f32.mrf.mxu0
        %886 = vdwg.mxu0
        %v887 = vmul.f32 %v882, 0.25
        %v888 = vld [vmem:[%s751] sm:$0xf]
        %v889 = vld [vmem:[%s751 + $0x4] sm:$0xf]
        %v890 = vld [vmem:[%s751 + $0x8] sm:$0xf]
        %v891 = vld [vmem:[%s751 + $0xc] sm:$0xf]
        %v896 = vunpack.c.l.b16 %v888
        %v897 = vunpack.c.l.b16 %v889
        %v898 = vunpack.c.l.b16 %v890
        %v899 = vunpack.c.l.b16 %v891
        %v900 = vpack.c.b16 %v897, %v896
        %v901 = vpack.c.b16 %v899, %v898
        %904 = vmatprep.subr.bf16.mxu0 0
        %905 = vmatpush1.bf16.msra.mxu0 0
        %906 = vmatprep.subr.bf16.mxu0 0
        %907 = vmatpush1.bf16.msra.mxu0 0
        %908 = vmatprep.subr.bf16.mxu0 0
        %909 = vmatpush1.bf16.msra.mxu0 0
        %910 = vmatprep.subr.bf16.mxu0 0
        %911 = vmatpush1.bf16.msra.mxu0 0
        %912 = vmatprep.subr.bf16.mxu0 0
        %913 = vmatpush1.bf16.msra.mxu0 0
        %914 = vmatprep.subr.bf16.mxu0 0
        %915 = vmatpush1.bf16.msra.mxu0 0
        %916 = vmatprep.subr.bf16.mxu0 0
        %917 = vmatpush1.bf16.msra.mxu0 %v901
        %918 = vmatprep.subr.bf16.mxu0 0
        %919 = vmatpush1.bf16.msra.mxu0 %v900
        %920 = vmatprep.subr.bf16.mxu0 0
        %921 = vmatpush2.bf16.msra.mxu0 0
        %922 = vmatprep.subr.bf16.mxu0 0
        %923 = vmatpush2.bf16.msra.mxu0 0
        %924 = vmatprep.subr.bf16.mxu0 0
        %925 = vmatpush2.bf16.msra.mxu0 0
        %926 = vmatprep.subr.bf16.mxu0 0
        %927 = vmatpush2.bf16.msra.mxu0 0
        %928 = vmatprep.subr.bf16.mxu0 0
        %929 = vmatpush2.bf16.msra.mxu0 0
        %930 = vmatprep.subr.bf16.mxu0 0
        %931 = vmatpush2.bf16.msra.mxu0 0
        %932 = vmatprep.subr.bf16.mxu0 0
        %933 = vmatpush2.bf16.msra.mxu0 0
        %934 = vmatprep.subr.bf16.mxu0 0
        %935 = vmatpush2.bf16.msra.mxu0 0
        %936 = vmatprep.mubr.bf16.mxu0 0
        %937 = vmatmul.mubr.bf16.gmra.mxu0 %v845
        %v938 = vpop.f32.mrf.mxu0
        %v939 = vadd.f32 0.0, %v938
        %v940 = vpop.f32.mrf.mxu0
        %v941 = vpop.f32.mrf.mxu0
        %v942 = vpop.f32.mrf.mxu0
        %943 = vdwg.mxu0
        %v944 = vld [vmem:[%s756] sm:$0xf]
        %v945 = vld [vmem:[%s756 + $0x4] sm:$0xf]
        %v946 = vld [vmem:[%s756 + $0x8] sm:$0xf]
        %v947 = vld [vmem:[%s756 + $0xc] sm:$0xf]
        %v952 = vunpack.c.l.b16 %v944
        %v953 = vunpack.c.l.b16 %v945
        %v954 = vunpack.c.l.b16 %v946
        %v955 = vunpack.c.l.b16 %v947
        %v956 = vpack.c.b16 %v953, %v952
        %v957 = vpack.c.b16 %v955, %v954
        %960 = vmatprep.subr.bf16.mxu0 0
        %961 = vmatpush1.bf16.msra.mxu0 0
        %962 = vmatprep.subr.bf16.mxu0 0
        %963 = vmatpush1.bf16.msra.mxu0 0
        %964 = vmatprep.subr.bf16.mxu0 0
        %965 = vmatpush1.bf16.msra.mxu0 0
        %966 = vmatprep.subr.bf16.mxu0 0
        %967 = vmatpush1.bf16.msra.mxu0 0
        %968 = vmatprep.subr.bf16.mxu0 0
        %969 = vmatpush1.bf16.msra.mxu0 0
        %970 = vmatprep.subr.bf16.mxu0 0
        %971 = vmatpush1.bf16.msra.mxu0 0
        %972 = vmatprep.subr.bf16.mxu0 0
        %973 = vmatpush1.bf16.msra.mxu0 %v957
        %974 = vmatprep.subr.bf16.mxu0 0
        %975 = vmatpush1.bf16.msra.mxu0 %v956
        %976 = vmatprep.subr.bf16.mxu0 0
        %977 = vmatpush2.bf16.msra.mxu0 0
        %978 = vmatprep.subr.bf16.mxu0 0
        %979 = vmatpush2.bf16.msra.mxu0 0
        %980 = vmatprep.subr.bf16.mxu0 0
        %981 = vmatpush2.bf16.msra.mxu0 0
        %982 = vmatprep.subr.bf16.mxu0 0
        %983 = vmatpush2.bf16.msra.mxu0 0
        %984 = vmatprep.subr.bf16.mxu0 0
        %985 = vmatpush2.bf16.msra.mxu0 0
        %986 = vmatprep.subr.bf16.mxu0 0
        %987 = vmatpush2.bf16.msra.mxu0 0
        %988 = vmatprep.subr.bf16.mxu0 0
        %989 = vmatpush2.bf16.msra.mxu0 0
        %990 = vmatprep.subr.bf16.mxu0 0
        %991 = vmatpush2.bf16.msra.mxu0 0
        %992 = vmatprep.mubr.bf16.mxu0 0
        %993 = vmatmul.mubr.bf16.gmra.mxu0 %v845
        %v994 = vpop.f32.mrf.mxu0
        %v995 = vadd.f32 0.0, %v994
        %v996 = vpop.f32.mrf.mxu0
        %v997 = vpop.f32.mrf.mxu0
        %v998 = vpop.f32.mrf.mxu0
        %999 = vdwg.mxu0
        %1001 = vrot.lane.b32.xlu0 %v887, 112
        %v1002 = vpop.permute.xlu0 %1001
        %1005 = vrot.lane.b32.xlu0 %v939, 112
        %v1006 = vpop.permute.xlu0 %1005
        %1009 = vrot.lane.b32.xlu0 %v995, 112
        %v1010 = vpop.permute.xlu0 %1009
        %v1012 = vpack.c.bf16 %v887, %v887
        %v1013 = vpack.c.bf16 %v1002, %v1002
        %v1014 = vpack.c.bf16 %v939, %v939
        %v1015 = vpack.c.bf16 %v1006, %v1006
        %v1016 = vpack.c.bf16 %v995, %v995
        %v1017 = vpack.c.bf16 %v1010, %v1010
        %v1018 = vlaneseq
        %v1019 = vshrl.u32 %v1018, 7
        %v1020 = vlaneseq
        %v1021 = vand.u32 %v1020, 127
        %vm1022 = vcmp.gt.s32.totalorder %v1021, %v1019
        %vm1023 = vcmask 130048
        %v1025 = vsel %vm1023, %v1012, 0
        %v1028 = vsel %vm1023, %v1014, 0
        %1030 = vmatprep.subr.bf16.mxu0 0
        %1031 = vmatpush1.bf16.xpose.msra.mxu0 0
        %1032 = vmatprep.subr.bf16.mxu0 0
        %1033 = vmatpush1.bf16.xpose.msra.mxu0 0
        %1034 = vmatprep.subr.bf16.mxu0 0
        %1035 = vmatpush1.bf16.xpose.msra.mxu0 0
        %1036 = vmatprep.subr.bf16.mxu0 0
        %1037 = vmatpush1.bf16.xpose.msra.mxu0 0
        %1038 = vmatprep.subr.bf16.mxu0 0
        %1039 = vmatpush1.bf16.xpose.msra.mxu0 0
        %1040 = vmatprep.subr.bf16.mxu0 0
        %1041 = vmatpush1.bf16.xpose.msra.mxu0 0
        %1042 = vmatprep.subr.bf16.mxu0 0
        %1043 = vmatpush1.bf16.xpose.msra.mxu0 0
        %1044 = vmatprep.subr.bf16.mxu0 0
        %1045 = vmatpush1.bf16.xpose.msra.mxu0 %v1028
        %1046 = vmatprep.subr.bf16.mxu0 0
        %1047 = vmatpush2.bf16.xpose.msra.mxu0 0
        %1048 = vmatprep.subr.bf16.mxu0 0
        %1049 = vmatpush2.bf16.xpose.msra.mxu0 0
        %1050 = vmatprep.subr.bf16.mxu0 0
        %1051 = vmatpush2.bf16.xpose.msra.mxu0 0
        %1052 = vmatprep.subr.bf16.mxu0 0
        %1053 = vmatpush2.bf16.xpose.msra.mxu0 0
        %1054 = vmatprep.subr.bf16.mxu0 0
        %1055 = vmatpush2.bf16.xpose.msra.mxu0 0
        %1056 = vmatprep.subr.bf16.mxu0 0
        %1057 = vmatpush2.bf16.xpose.msra.mxu0 0
        %1058 = vmatprep.subr.bf16.mxu0 0
        %1059 = vmatpush2.bf16.xpose.msra.mxu0 0
        %1060 = vmatprep.subr.bf16.mxu0 0
        %1061 = vmatpush2.bf16.xpose.msra.mxu0 0
        %1062 = vmatprep.mubr.bf16.mxu0 0
        %1063 = vmatmul.mubr.bf16.gmra.mxu0 %v1025
        %v1064 = vpop.f32.mrf.mxu0
        %v1065 = vadd.f32 0.0, %v1064
        %v1066 = vpop.f32.mrf.mxu0
        %v1067 = vpop.f32.mrf.mxu0
        %v1068 = vpop.f32.mrf.mxu0
        %1069 = vdwg.mxu0
        %v1071 = vsel %vm1023, %v1013, 0
        %v1074 = vsel %vm1023, %v1015, 0
        %1076 = vmatprep.subr.bf16.mxu0 0
        %1077 = vmatpush1.bf16.xpose.msra.mxu0 0
        %1078 = vmatprep.subr.bf16.mxu0 0
        %1079 = vmatpush1.bf16.xpose.msra.mxu0 0
        %1080 = vmatprep.subr.bf16.mxu0 0
        %1081 = vmatpush1.bf16.xpose.msra.mxu0 0
        %1082 = vmatprep.subr.bf16.mxu0 0
        %1083 = vmatpush1.bf16.xpose.msra.mxu0 0
        %1084 = vmatprep.subr.bf16.mxu0 0
        %1085 = vmatpush1.bf16.xpose.msra.mxu0 0
        %1086 = vmatprep.subr.bf16.mxu0 0
        %1087 = vmatpush1.bf16.xpose.msra.mxu0 0
        %1088 = vmatprep.subr.bf16.mxu0 0
        %1089 = vmatpush1.bf16.xpose.msra.mxu0 0
        %1090 = vmatprep.subr.bf16.mxu0 0
        %1091 = vmatpush1.bf16.xpose.msra.mxu0 %v1074
        %1092 = vmatprep.subr.bf16.mxu0 0
        %1093 = vmatpush2.bf16.xpose.msra.mxu0 0
        %1094 = vmatprep.subr.bf16.mxu0 0
        %1095 = vmatpush2.bf16.xpose.msra.mxu0 0
        %1096 = vmatprep.subr.bf16.mxu0 0
        %1097 = vmatpush2.bf16.xpose.msra.mxu0 0
        %1098 = vmatprep.subr.bf16.mxu0 0
        %1099 = vmatpush2.bf16.xpose.msra.mxu0 0
        %1100 = vmatprep.subr.bf16.mxu0 0
        %1101 = vmatpush2.bf16.xpose.msra.mxu0 0
        %1102 = vmatprep.subr.bf16.mxu0 0
        %1103 = vmatpush2.bf16.xpose.msra.mxu0 0
        %1104 = vmatprep.subr.bf16.mxu0 0
        %1105 = vmatpush2.bf16.xpose.msra.mxu0 0
        %1106 = vmatprep.subr.bf16.mxu0 0
        %1107 = vmatpush2.bf16.xpose.msra.mxu0 0
        %1108 = vmatprep.mubr.bf16.mxu0 0
        %1109 = vmatmul.mubr.bf16.gmra.mxu0 %v1071
        %v1110 = vpop.f32.mrf.mxu0
        %v1111 = vadd.f32 0.0, %v1110
        %v1112 = vpop.f32.mrf.mxu0
        %v1113 = vpop.f32.mrf.mxu0
        %v1114 = vpop.f32.mrf.mxu0
        %1115 = vdwg.mxu0
        %v1116 = vsel %vm1022, 1, 0
        %vm1117 = vcmp.eq.s32.totalorder %v1116, 1
        %v1118 = vsel %vm1117, -1e+30, %v1065
        %v1119 = vsel %vm1117, -1e+30, %v1111
        %vm1120 = vcmask 64512
        %v1121 = vsel %vm1120, %v1118, -inf
        %1122 = vmax.xlane.f32.xlu0 %v1121
        %v1123 = vpop.xlane.xlu0 %1122
        %v1124 = vsel %vm1120, %v1119, -inf
        %1125 = vmax.xlane.f32.xlu0 %v1124
        %v1126 = vpop.xlane.xlu0 %1125
        %v1127 = vsub.f32 %v1118, %v1123
        %v1128 = vsub.f32 %v1119, %v1126
        %v1129 = vmul.f32 %v1127, 1.442695
        %v1130 = vpow.pop %v1129
        %v1131 = vmul.f32 %v1128, 1.442695
        %v1132 = vpow.pop %v1131
        %v1133 = vsel %vm1120, %v1130, 0.0
        %1134 = vadd.xlane.f32.xlu0 %v1133
        %v1135 = vpop.xlane.xlu0 %1134
        %v1136 = vsel %vm1120, %v1132, 0.0
        %1137 = vadd.xlane.f32.xlu0 %v1136
        %v1138 = vpop.xlane.xlu0 %1137
        %v1139 = vrcp.pop %v1135
        %v1140 = vrcp.pop %v1138
        %v1141 = vmul.f32 %v1130, %v1139
        %v1142 = vmul.f32 %v1132, %v1140
        %v1143 = vpack.c.bf16 %v1141, %v1141
        %v1144 = vpack.c.bf16 %v1142, %v1142
        %v1146 = vsel %vm1120, %v1143, 0
        %vm1148 = vcmask 1043456
        %v1150 = vsel %vm1148, %v1016, 0
        %1152 = vmatprep.subr.bf16.mxu0 0
        %1153 = vmatpush1.bf16.msra.mxu0 0
        %1154 = vmatprep.subr.bf16.mxu0 0
        %1155 = vmatpush1.bf16.msra.mxu0 0
        %1156 = vmatprep.subr.bf16.mxu0 0
        %1157 = vmatpush1.bf16.msra.mxu0 0
        %1158 = vmatprep.subr.bf16.mxu0 0
        %1159 = vmatpush1.bf16.msra.mxu0 0
        %1160 = vmatprep.subr.bf16.mxu0 0
        %1161 = vmatpush1.bf16.msra.mxu0 0
        %1162 = vmatprep.subr.bf16.mxu0 0
        %1163 = vmatpush1.bf16.msra.mxu0 0
        %1164 = vmatprep.subr.bf16.mxu0 0
        %1165 = vmatpush1.bf16.msra.mxu0 0
        %1166 = vmatprep.subr.bf16.mxu0 0
        %1167 = vmatpush1.bf16.msra.mxu0 %v1150
        %1168 = vmatprep.subr.bf16.mxu0 0
        %1169 = vmatpush2.bf16.msra.mxu0 0
        %1170 = vmatprep.subr.bf16.mxu0 0
        %1171 = vmatpush2.bf16.msra.mxu0 0
        %1172 = vmatprep.subr.bf16.mxu0 0
        %1173 = vmatpush2.bf16.msra.mxu0 0
        %1174 = vmatprep.subr.bf16.mxu0 0
        %1175 = vmatpush2.bf16.msra.mxu0 0
        %1176 = vmatprep.subr.bf16.mxu0 0
        %1177 = vmatpush2.bf16.msra.mxu0 0
        %1178 = vmatprep.subr.bf16.mxu0 0
        %1179 = vmatpush2.bf16.msra.mxu0 0
        %1180 = vmatprep.subr.bf16.mxu0 0
        %1181 = vmatpush2.bf16.msra.mxu0 0
        %1182 = vmatprep.subr.bf16.mxu0 0
        %1183 = vmatpush2.bf16.msra.mxu0 0
        %1184 = vmatprep.mubr.bf16.mxu0 0
        %1185 = vmatmul.mubr.bf16.gmra.mxu0 %v1146
        %v1186 = vpop.f32.mrf.mxu0
        %v1187 = vadd.f32 0.0, %v1186
        %v1188 = vpop.f32.mrf.mxu0
        %v1189 = vpop.f32.mrf.mxu0
        %v1190 = vpop.f32.mrf.mxu0
        %1191 = vdwg.mxu0
        %v1193 = vsel %vm1120, %v1144, 0
        %v1196 = vsel %vm1148, %v1017, 0
        %1198 = vmatprep.subr.bf16.mxu0 0
        %1199 = vmatpush1.bf16.msra.mxu0 0
        %1200 = vmatprep.subr.bf16.mxu0 0
        %1201 = vmatpush1.bf16.msra.mxu0 0
        %1202 = vmatprep.subr.bf16.mxu0 0
        %1203 = vmatpush1.bf16.msra.mxu0 0
        %1204 = vmatprep.subr.bf16.mxu0 0
        %1205 = vmatpush1.bf16.msra.mxu0 0
        %1206 = vmatprep.subr.bf16.mxu0 0
        %1207 = vmatpush1.bf16.msra.mxu0 0
        %1208 = vmatprep.subr.bf16.mxu0 0
        %1209 = vmatpush1.bf16.msra.mxu0 0
        %1210 = vmatprep.subr.bf16.mxu0 0
        %1211 = vmatpush1.bf16.msra.mxu0 0
        %1212 = vmatprep.subr.bf16.mxu0 0
        %1213 = vmatpush1.bf16.msra.mxu0 %v1196
        %1214 = vmatprep.subr.bf16.mxu0 0
        %1215 = vmatpush2.bf16.msra.mxu0 0
        %1216 = vmatprep.subr.bf16.mxu0 0
        %1217 = vmatpush2.bf16.msra.mxu0 0
        %1218 = vmatprep.subr.bf16.mxu0 0
        %1219 = vmatpush2.bf16.msra.mxu0 0
        %1220 = vmatprep.subr.bf16.mxu0 0
        %1221 = vmatpush2.bf16.msra.mxu0 0
        %1222 = vmatprep.subr.bf16.mxu0 0
        %1223 = vmatpush2.bf16.msra.mxu0 0
        %1224 = vmatprep.subr.bf16.mxu0 0
        %1225 = vmatpush2.bf16.msra.mxu0 0
        %1226 = vmatprep.subr.bf16.mxu0 0
        %1227 = vmatpush2.bf16.msra.mxu0 0
        %1228 = vmatprep.subr.bf16.mxu0 0
        %1229 = vmatpush2.bf16.msra.mxu0 0
        %1230 = vmatprep.mubr.bf16.mxu0 0
        %1231 = vmatmul.mubr.bf16.gmra.mxu0 %v1193
        %v1232 = vpop.f32.mrf.mxu0
        %v1233 = vadd.f32 0.0, %v1232
        %v1234 = vpop.f32.mrf.mxu0
        %v1235 = vpop.f32.mrf.mxu0
        %v1236 = vpop.f32.mrf.mxu0
        %1237 = vdwg.mxu0
        %1239 = vrot.lane.b32.xlu0 %v1233, 16
        %v1240 = vpop.permute.xlu0 %1239
        %v1242 = vsel %vm1023, %v1187, %v1240
        %v1243 = vpack.c.bf16 %v1242, %v1242
        %v1244 = vld [vmem:[%s761] sm:$0xf]
        %v1245 = vld [vmem:[%s761 + $0x4] sm:$0xf]
        %v1246 = vld [vmem:[%s761 + $0x8] sm:$0xf]
        %v1247 = vld [vmem:[%s761 + $0xc] sm:$0xf]
        %v1248 = vld [vmem:[%s764] sm:$0x1]
        %v1250 = vlaneseq
        %v1251 = vshrl.u32 %v1250, 7
        %v1252 = vsub.s32 0, %v1251
        %v1253 = vrot.slane %v1248, %v1252
        %v1259 = vunpack.c.l.b16 %v1244
        %v1260 = vunpack.c.l.b16 %v1245
        %v1261 = vunpack.c.l.b16 %v1246
        %v1262 = vunpack.c.l.b16 %v1247
        %v1263 = vpack.c.b16 %v1260, %v1259
        %v1264 = vpack.c.b16 %v1262, %v1261
        %v1268 = vsel %vm798, %v1243, 0
        %1270 = vmatprep.subr.bf16.mxu0 0
        %1271 = vmatpush1.bf16.msra.mxu0 0
        %1272 = vmatprep.subr.bf16.mxu0 0
        %1273 = vmatpush1.bf16.msra.mxu0 0
        %1274 = vmatprep.subr.bf16.mxu0 0
        %1275 = vmatpush1.bf16.msra.mxu0 0
        %1276 = vmatprep.subr.bf16.mxu0 0
        %1277 = vmatpush1.bf16.msra.mxu0 0
        %1278 = vmatprep.subr.bf16.mxu0 0
        %1279 = vmatpush1.bf16.msra.mxu0 0
        %1280 = vmatprep.subr.bf16.mxu0 0
        %1281 = vmatpush1.bf16.msra.mxu0 0
        %1282 = vmatprep.subr.bf16.mxu0 0
        %1283 = vmatpush1.bf16.msra.mxu0 %v1264
        %1284 = vmatprep.subr.bf16.mxu0 0
        %1285 = vmatpush1.bf16.msra.mxu0 %v1263
        %1286 = vmatprep.subr.bf16.mxu0 0
        %1287 = vmatpush2.bf16.msra.mxu0 0
        %1288 = vmatprep.subr.bf16.mxu0 0
        %1289 = vmatpush2.bf16.msra.mxu0 0
        %1290 = vmatprep.subr.bf16.mxu0 0
        %1291 = vmatpush2.bf16.msra.mxu0 0
        %1292 = vmatprep.subr.bf16.mxu0 0
        %1293 = vmatpush2.bf16.msra.mxu0 0
        %1294 = vmatprep.subr.bf16.mxu0 0
        %1295 = vmatpush2.bf16.msra.mxu0 0
        %1296 = vmatprep.subr.bf16.mxu0 0
        %1297 = vmatpush2.bf16.msra.mxu0 0
        %1298 = vmatprep.subr.bf16.mxu0 0
        %1299 = vmatpush2.bf16.msra.mxu0 0
        %1300 = vmatprep.subr.bf16.mxu0 0
        %1301 = vmatpush2.bf16.msra.mxu0 0
        %1302 = vmatprep.mubr.bf16.mxu0 0
        %1303 = vmatmul.mubr.bf16.gmra.mxu0 %v1268
        %v1304 = vpop.f32.mrf.mxu0
        %v1305 = vadd.f32 %v1253, %v1304
        %v1306 = vpop.f32.mrf.mxu0
        %v1307 = vpop.f32.mrf.mxu0
        %v1308 = vpop.f32.mrf.mxu0
        %1309 = vdwg.mxu0
        %v1310 = vadd.f32 %v795, %v1305
        %v1311 = vld [vmem:[%s767] sm:$0x1]
        %v1312 = vld [vmem:[%s770] sm:$0x1]
        %v1313 = vsel %vm798, %v1310, 0.0
        %1314 = vadd.xlane.f32.xlu0 %v1313
        %v1315 = vpop.xlane.xlu0 %1314
        %v1316 = vmul.f32 %v1315, %v802
        %v1317 = vsub.f32 %v1310, %v1316
        %v1318 = vmul.f32 %v1317, %v1317
        %v1319 = vsel %vm798, %v1318, 0.0
        %1320 = vadd.xlane.f32.xlu0 %v1319
        %v1321 = vpop.xlane.xlu0 %1320
        %v1322 = vmul.f32 %v1321, %v802
        %v1323 = vadd.f32 %v1322, 1e-05
        %v1324 = vrsqrt.pop %v1323
        %v1325 = vmul.f32 %v1317, %v1324
        %v1327 = vlaneseq
        %v1328 = vshrl.u32 %v1327, 7
        %v1329 = vsub.s32 0, %v1328
        %v1330 = vrot.slane %v1311, %v1329
        %v1332 = vmul.f32 %v1330, %v1325
        %v1334 = vlaneseq
        %v1335 = vshrl.u32 %v1334, 7
        %v1336 = vsub.s32 0, %v1335
        %v1337 = vrot.slane %v1312, %v1336
        %v1339 = vadd.f32 %v1332, %v1337
        %v1340 = vpack.c.bf16 %v1339, %v1339
        %v1341 = vld [vmem:[%s775] sm:$0xf]
        %v1342 = vld [vmem:[%s775 + $0x4] sm:$0xf]
        %v1343 = vld [vmem:[%s775 + $0x8] sm:$0xf]
        %v1344 = vld [vmem:[%s775 + $0xc] sm:$0xf]
        %v1345 = vld [vmem:[%s778] sm:$0x1]
        %v1347 = vlaneseq
        %v1348 = vshrl.u32 %v1347, 7
        %v1349 = vsub.s32 0, %v1348
        %v1350 = vrot.slane %v1345, %v1349
        %v1356 = vunpack.c.l.b16 %v1341
        %v1357 = vunpack.c.l.b16 %v1342
        %v1358 = vunpack.c.l.b16 %v1343
        %v1359 = vunpack.c.l.b16 %v1344
        %v1360 = vpack.c.b16 %v1357, %v1356
        %v1361 = vpack.c.b16 %v1359, %v1358
        %v1365 = vsel %vm798, %v1340, 0
        %1367 = vmatprep.subr.bf16.mxu0 0
        %1368 = vmatpush1.bf16.msra.mxu0 0
        %1369 = vmatprep.subr.bf16.mxu0 0
        %1370 = vmatpush1.bf16.msra.mxu0 0
        %1371 = vmatprep.subr.bf16.mxu0 0
        %1372 = vmatpush1.bf16.msra.mxu0 0
        %1373 = vmatprep.subr.bf16.mxu0 0
        %1374 = vmatpush1.bf16.msra.mxu0 0
        %1375 = vmatprep.subr.bf16.mxu0 0
        %1376 = vmatpush1.bf16.msra.mxu0 0
        %1377 = vmatprep.subr.bf16.mxu0 0
        %1378 = vmatpush1.bf16.msra.mxu0 0
        %1379 = vmatprep.subr.bf16.mxu0 0
        %1380 = vmatpush1.bf16.msra.mxu0 %v1361
        %1381 = vmatprep.subr.bf16.mxu0 0
        %1382 = vmatpush1.bf16.msra.mxu0 %v1360
        %1383 = vmatprep.subr.bf16.mxu0 0
        %1384 = vmatpush2.bf16.msra.mxu0 0
        %1385 = vmatprep.subr.bf16.mxu0 0
        %1386 = vmatpush2.bf16.msra.mxu0 0
        %1387 = vmatprep.subr.bf16.mxu0 0
        %1388 = vmatpush2.bf16.msra.mxu0 0
        %1389 = vmatprep.subr.bf16.mxu0 0
        %1390 = vmatpush2.bf16.msra.mxu0 0
        %1391 = vmatprep.subr.bf16.mxu0 0
        %1392 = vmatpush2.bf16.msra.mxu0 0
        %1393 = vmatprep.subr.bf16.mxu0 0
        %1394 = vmatpush2.bf16.msra.mxu0 0
        %1395 = vmatprep.subr.bf16.mxu0 0
        %1396 = vmatpush2.bf16.msra.mxu0 0
        %1397 = vmatprep.subr.bf16.mxu0 0
        %1398 = vmatpush2.bf16.msra.mxu0 0
        %1399 = vmatprep.mubr.bf16.mxu0 0
        %1400 = vmatmul.mubr.bf16.gmra.mxu0 %v1365
        %v1401 = vpop.f32.mrf.mxu0
        %v1402 = vadd.f32 %v1350, %v1401
        %v1403 = vpop.f32.mrf.mxu0
        %v1404 = vpop.f32.mrf.mxu0
        %v1405 = vpop.f32.mrf.mxu0
        %1406 = vdwg.mxu0
        %v1407 = vmul.f32 %v1402, 0.5
        %v1408 = vmul.f32 %v1402, 0.044715
        %v1409 = vmul.f32 %v1408, %v1402
        %v1410 = vmul.f32 %v1409, %v1402
        %v1411 = vadd.f32 %v1402, %v1410
        %v1412 = vmul.f32 %v1411, 0.7978846
        %v1413 = vtanh.pop %v1412
        %v1414 = vadd.f32 %v1413, 1.0
        %v1415 = vmul.f32 %v1407, %v1414
        %v1416 = vpack.c.bf16 %v1415, %v1415
        %v1417 = vld [vmem:[%s783] sm:$0xf]
        %v1418 = vld [vmem:[%s783 + $0x4] sm:$0xf]
        %v1419 = vld [vmem:[%s783 + $0x8] sm:$0xf]
        %v1420 = vld [vmem:[%s783 + $0xc] sm:$0xf]
        %v1421 = vld [vmem:[%s783 + $0x10] sm:$0xf]
        %v1422 = vld [vmem:[%s783 + $0x14] sm:$0xf]
        %v1423 = vld [vmem:[%s783 + $0x18] sm:$0xf]
        %v1424 = vld [vmem:[%s783 + $0x1c] sm:$0xf]
        %v1425 = vld [vmem:[%s783 + $0x20] sm:$0xf]
        %v1426 = vld [vmem:[%s783 + $0x24] sm:$0xf]
        %v1427 = vld [vmem:[%s783 + $0x28] sm:$0xf]
        %v1428 = vld [vmem:[%s783 + $0x2c] sm:$0xf]
        %v1429 = vld [vmem:[%s783 + $0x30] sm:$0xf]
        %v1430 = vld [vmem:[%s783 + $0x34] sm:$0xf]
        %v1431 = vld [vmem:[%s783 + $0x38] sm:$0xf]
        %v1432 = vld [vmem:[%s783 + $0x3c] sm:$0xf]
        %v1433 = vld [vmem:[%s786] sm:$0x1]
        %v1435 = vlaneseq
        %v1436 = vshrl.u32 %v1435, 7
        %v1437 = vsub.s32 0, %v1436
        %v1438 = vrot.slane %v1433, %v1437
        %v1456 = vunpack.c.l.b16 %v1417
        %v1457 = vunpack.c.l.b16 %v1418
        %v1458 = vunpack.c.l.b16 %v1419
        %v1459 = vunpack.c.l.b16 %v1420
        %v1460 = vunpack.c.l.b16 %v1421
        %v1461 = vunpack.c.l.b16 %v1422
        %v1462 = vunpack.c.l.b16 %v1423
        %v1463 = vunpack.c.l.b16 %v1424
        %v1464 = vunpack.c.l.b16 %v1425
        %v1465 = vunpack.c.l.b16 %v1426
        %v1466 = vunpack.c.l.b16 %v1427
        %v1467 = vunpack.c.l.b16 %v1428
        %v1468 = vunpack.c.l.b16 %v1429
        %v1469 = vunpack.c.l.b16 %v1430
        %v1470 = vunpack.c.l.b16 %v1431
        %v1471 = vunpack.c.l.b16 %v1432
        %v1472 = vpack.c.b16 %v1457, %v1456
        %v1473 = vpack.c.b16 %v1459, %v1458
        %v1474 = vpack.c.b16 %v1461, %v1460
        %v1475 = vpack.c.b16 %v1463, %v1462
        %v1476 = vpack.c.b16 %v1465, %v1464
        %v1477 = vpack.c.b16 %v1467, %v1466
        %v1478 = vpack.c.b16 %v1469, %v1468
        %v1479 = vpack.c.b16 %v1471, %v1470
        %1488 = vmatprep.subr.bf16.mxu0 0
        %1489 = vmatpush1.bf16.msra.mxu0 %v1479
        %1490 = vmatprep.subr.bf16.mxu0 0
        %1491 = vmatpush1.bf16.msra.mxu0 %v1478
        %1492 = vmatprep.subr.bf16.mxu0 0
        %1493 = vmatpush1.bf16.msra.mxu0 %v1477
        %1494 = vmatprep.subr.bf16.mxu0 0
        %1495 = vmatpush1.bf16.msra.mxu0 %v1476
        %1496 = vmatprep.subr.bf16.mxu0 0
        %1497 = vmatpush1.bf16.msra.mxu0 %v1475
        %1498 = vmatprep.subr.bf16.mxu0 0
        %1499 = vmatpush1.bf16.msra.mxu0 %v1474
        %1500 = vmatprep.subr.bf16.mxu0 0
        %1501 = vmatpush1.bf16.msra.mxu0 %v1473
        %1502 = vmatprep.subr.bf16.mxu0 0
        %1503 = vmatpush1.bf16.msra.mxu0 %v1472
        %1504 = vmatprep.subr.bf16.mxu0 0
        %1505 = vmatpush2.bf16.msra.mxu0 0
        %1506 = vmatprep.subr.bf16.mxu0 0
        %1507 = vmatpush2.bf16.msra.mxu0 0
        %1508 = vmatprep.subr.bf16.mxu0 0
        %1509 = vmatpush2.bf16.msra.mxu0 0
        %1510 = vmatprep.subr.bf16.mxu0 0
        %1511 = vmatpush2.bf16.msra.mxu0 0
        %1512 = vmatprep.subr.bf16.mxu0 0
        %1513 = vmatpush2.bf16.msra.mxu0 0
        %1514 = vmatprep.subr.bf16.mxu0 0
        %1515 = vmatpush2.bf16.msra.mxu0 0
        %1516 = vmatprep.subr.bf16.mxu0 0
        %1517 = vmatpush2.bf16.msra.mxu0 0
        %1518 = vmatprep.subr.bf16.mxu0 0
        %1519 = vmatpush2.bf16.msra.mxu0 0
        %1520 = vmatprep.mubr.bf16.mxu0 0
        %1521 = vmatmul.mubr.bf16.gmra.mxu0 %v1416
        %v1522 = vpop.f32.mrf.mxu0
        %v1523 = vadd.f32 %v1438, %v1522
        %v1524 = vpop.f32.mrf.mxu0
        %v1525 = vpop.f32.mrf.mxu0
        %v1526 = vpop.f32.mrf.mxu0
        %1527 = vdwg.mxu0
        %v1528 = vadd.f32 %v1310, %v1523
        %1529 = vst.msk [vmem:[%s738] sm:$0xff] %vm798, %v1528
        %p1530 = scmp.eq.s32.totalorder %s41, 1
        // Predicated region
        $region97: #{tpu_custom_call.1} parent=83 // pred_check
          %p1531 = pneg %p1530
        $region98: #{tpu_custom_call.1} parent=83 // pred_check_branch
          %1533 = sbr.rel (%p1531) target = $region100
        $region99: #{tpu_custom_call.1} parent=83 // pred_region
          %v1534 = vld [vmem:[%s738] sm:$0xff]
          %v1535 = vld [vmem:[%s14] sm:$0x1]
          %v1536 = vld [vmem:[%s15] sm:$0x1]
          %v1537 = vsel %vm798, %v1534, 0.0
          %1538 = vadd.xlane.f32.xlu0 %v1537
          %v1539 = vpop.xlane.xlu0 %1538
          %v1540 = vmul.f32 %v1539, %v802
          %v1541 = vsub.f32 %v1534, %v1540
          %v1542 = vmul.f32 %v1541, %v1541
          %v1543 = vsel %vm798, %v1542, 0.0
          %1544 = vadd.xlane.f32.xlu0 %v1543
          %v1545 = vpop.xlane.xlu0 %1544
          %v1546 = vmul.f32 %v1545, %v802
          %v1547 = vadd.f32 %v1546, 1e-05
          %v1548 = vrsqrt.pop %v1547
          %v1549 = vmul.f32 %v1541, %v1548
          %v1551 = vlaneseq
          %v1552 = vshrl.u32 %v1551, 7
          %v1553 = vsub.s32 0, %v1552
          %v1554 = vrot.slane %v1535, %v1553
          %v1556 = vmul.f32 %v1554, %v1549
          %v1558 = vlaneseq
          %v1559 = vshrl.u32 %v1558, 7
          %v1560 = vsub.s32 0, %v1559
          %v1561 = vrot.slane %v1536, %v1560
          %v1563 = vadd.f32 %v1556, %v1561
          %1564 = vst.msk [vmem:[%s738] sm:$0xff] %vm798, %v1563
        $region100: #{tpu_custom_call.1} parent=83 // pred_fallthru
          _
        %s1565 = sand.u32 %s462, 1
        %s1566 = scalar_lea.sflag [#allocation4], %s1565
        %s1567 = sand.u32 %s462, 1
        %s1568 = smul.addr %s1567, 8
        %s1569 = scalar_lea.vmem [#allocation7], %s1568
        // Predicated region
        $region101: #{tpu_custom_call.1} parent=83 // pred_check
          %p1570 = pneg %p472
        $region102: #{tpu_custom_call.1} parent=83 // pred_check_branch
          %1572 = sbr.rel (%p1570) target = $region104
        $region103: #{tpu_custom_call.1} parent=83 // pred_region
          %s1574 = ssub.s32 128, 128
          %1575 = vsyncadd %s1566, %s1574
          %s1576 = smul.addr %s40, 128
          %s1577 = scalar_lea.hbm %s16, %s1576
          %s1579 = sshll.u32 %s1569, 4
          %s1580 = int_to_ptr.vmem [resolvable:$true] %s1579
          %1582 = dma.vmem_to_hbm [thread:$0]  %s1580, 128, %s1577, %s1566
        $region104: #{tpu_custom_call.1} parent=83 // pred_fallthru
          _
      $region84: #{tpu_custom_call.1} parent=5 // pred_fallthru
        _
      %p1583 = scmp.le.s32.totalorder 2, %s31
      // Predicated region
      $region105: #{tpu_custom_call.1} parent=5 // pred_check
        %p1584 = pneg %p1583
      $region106: #{tpu_custom_call.1} parent=5 // pred_check_branch
        %1586 = sbr.rel (%p1584) target = $region108
      $region107: #{tpu_custom_call.1} parent=5 // pred_region
        %s1587 = ssub.s32 %s31, 2
        // Predicated region
        $region109: #{tpu_custom_call.1} parent=107 // pred_check
          %p1588 = pneg %p478
        $region110: #{tpu_custom_call.1} parent=107 // pred_check_branch
          %1590 = sbr.rel (%p1588) target = $region112
        $region111: #{tpu_custom_call.1} parent=107 // pred_region
          %s1591 = sand.u32 %s463, 1
          %s1592 = scalar_lea.sflag [#allocation4], %s1591
          %s1593 = sand.u32 %s463, 1
          %s1594 = smul.addr %s1593, 8
          %s1595 = scalar_lea.vmem [#allocation7], %s1594
          %1596 = dma.done %s1592, 128
        $region112: #{tpu_custom_call.1} parent=107 // pred_fallthru
          _
      $region108: #{tpu_custom_call.1} parent=5 // pred_fallthru
        _
    $region6: #{tpu_custom_call.1} parent=1 // loop_footer
      %s35 = sadd.s32 1, %s31
    $region7: #{tpu_custom_call.1} parent=1 // loop_footer_branch
      %30 = sbr.rel target = $region3
    $region8: #{tpu_custom_call.1} parent=1 // loop_exit
      _
    %1597 = vsyncpa [#allocation3], 1
    %s1598 = scalar_lea.sflag [#allocation3], 1
    %1599 = vsyncpa %s1598, 1
    %1600 = vsyncpa [#allocation6], 1
    %s1601 = scalar_lea.sflag [#allocation6], 1
    %1602 = vsyncpa %s1601, 1
    %1603 = vsyncpa [#allocation4], 1
    %s1604 = scalar_lea.sflag [#allocation4], 1
    %1605 = vsyncpa %s1604, 1

</llo_original>
